<compile_context>
chip_gen: v7x
topology: tpu7x:2x2x1
jax: 0.10.0
libtpu: 0.0.40
codegen_flags: <defaults>
</compile_context>

<pallas_src>
import functools

import jax
import jax.numpy as jnp
from jax.experimental import pallas as pl
from jax.experimental.pallas import tpu as pltpu


# ---------------------------------------------------------------------------
# Kernel: 3x3 SAME conv == ONE K-folded band matmul + bias + ReLU
#         [+ fused 2x2 stride-2 max pool]
# ---------------------------------------------------------------------------
def _conv_band_kernel(x_ref, top_ref, bot_ref, w_ref, b_ref, o_ref,
                      *, rows_in, pooled):
    """One (batch, time-tile) grid step.

    x_ref   : (1, rows_in, DCin)    main input rows of this tile
    top_ref : (1, 8, DCin)          aligned block whose LAST row is the halo
                                    row just above the tile
    bot_ref : (1, 8, DCin)          aligned block whose FIRST row is the halo
                                    row just below the tile
    w_ref   : (3*DCin, DCout)       K-folded block-Toeplitz band weights
    b_ref   : (1, DCout)            bias replicated to the band column layout
    o_ref   : (1, rows_out, DCstore)
    """
    i = pl.program_id(1)
    last = pl.num_programs(1) - 1

    x = x_ref[0]                                   # (rows_in, DCin)
    top = top_ref[0][7:8, :]                       # row just above the tile
    bot = bot_ref[0][0:1, :]                       # row just below the tile
    # Zero the halo rows at the sequence boundaries (time direction of the
    # SAME padding); the D-direction zero padding is baked into the band.
    top = jnp.where(i == 0, jnp.zeros_like(top), top)
    bot = jnp.where(i == last, jnp.zeros_like(bot), bot)

    xin = jnp.concatenate([top, x, bot], axis=0)   # (rows_in + 2, DCin)
    # Fold the 3 dy taps into the contraction dim -> single MXU pass.
    x3 = jnp.concatenate([xin[0:rows_in],
                          xin[1:rows_in + 1],
                          xin[2:rows_in + 2]], axis=1)        # (rows_in, 3*DCin)

    acc = jnp.dot(x3, w_ref[...], preferred_element_type=jnp.float32)
    h = jnp.maximum(acc + b_ref[0], 0.0)           # bias + ReLU in f32 (vregs)

    if pooled:
        # Band columns are ordered [even-d | odd-d]: D-pool is a lane-half
        # max, T-pool is a consecutive-row-pair max.
        half = h.shape[1] // 2
        h = jnp.maximum(h[:, :half], h[:, half:])              # pool over D
        h = jnp.max(h.reshape(rows_in // 2, 2, half), axis=1)  # pool over T
    o_ref[0] = h.astype(o_ref.dtype)


# ---------------------------------------------------------------------------
# Generation-aware VMEM budgeting + tile sizing
# ---------------------------------------------------------------------------
def _vmem_params():
    """(picker soft budget, vmem_limit_bytes) derived from physical VMEM."""
    try:
        phys = int(pltpu.get_tpu_info().vmem_capacity_bytes)
    except Exception:
        phys = 64 * 1024 * 1024                    # conservative (v7x-sized)
    budget = int(phys * 0.40)
    limit = max(min(int(phys * 0.75), phys - (8 << 20)), 32 << 20)
    return budget, limit


def _pick_row_tile(t_out, rows_per_out, dc_in, dc_conv, dc_store, act_bytes,
                   cap, budget_bytes):
    """Largest output-row tile that divides t_out, keeps blocks aligned and
    keeps double-buffered blocks + in-kernel temporaries under budget."""
    def fits(t):
        r_in = t * rows_per_out
        blocks = (2 * r_in * dc_in * act_bytes            # input tile, 2 bufs
                  + 2 * 2 * 8 * dc_in * act_bytes         # two 8-row halos
                  + 2 * 3 * dc_in * dc_conv * act_bytes   # K-folded weights
                  + 2 * dc_conv * 4                       # bias row (f32)
                  + 2 * t * dc_store * act_bytes)         # output tile, 2 bufs
        temps = ((r_in + 2) * dc_in * act_bytes           # xin concat
                 + r_in * 3 * dc_in * act_bytes           # K-folded x3
                 + 2 * r_in * dc_conv * 4)                # f32 acc + h
        return blocks + 2 * temps <= budget_bytes         # 2x temp headroom

    candidates = []
    if t_out <= cap:
        candidates.append(t_out)                  # full extent (always legal)
    # bf16 rows pack 2/sublane -> prefer multiples of 16; allow 8 for f32.
    steps = (16,) if act_bytes < 4 else (16, 8)
    for step in steps:
        t = (min(cap, t_out) // step) * step
        while t >= step:
            if t_out % t == 0 and t not in candidates:
                candidates.append(t)
            t -= step
    for t in candidates:
        if fits(t):
            return t
    # Nothing under the soft budget (odd t_out / huge D*C): take the smallest
    # aligned candidate instead of a giant over-budget tile.
    # TODO(synk): ragged time tiling for t_out with no aligned divisor.
    return candidates[-1] if candidates else t_out


# ---------------------------------------------------------------------------
# Band-weight construction (wrapper-side, tiny)
# ---------------------------------------------------------------------------
def _band_weights_and_bias(w, b, d, *, pooled, c_major, dtype):
    """w: (3, 3, Cin, Cout), b: (Cout,), d: conv-resolution feature width.

    Returns (wband (3*d*Cin, d*Cout), bias_row (1, d*Cout) f32) with output
    columns ordered:
      * not pooled          : q*Cout + co                       (d-major)
      * pooled,  d-major    : [even-q | odd-q], each k*Cout + co
      * pooled,  c-major    : [even-q | odd-q], each co*(d//2) + k
    Rows are the K-folded dy taps: [dy=0 block ; dy=1 block ; dy=2 block].
    The band encodes the 3 dx taps and the zero padding along D.
    """
    _, _, cin, cout = w.shape
    w = w.astype(jnp.float32)
    b = b.astype(jnp.float32)
    bands = []
    for dy in range(3):
        a = jnp.zeros((d, cin, d, cout), jnp.float32)
        for dx in range(3):
            # shift[p, q] = 1  iff  p == q + (dx - 1)  (input col p feeds q)
            shift = jnp.eye(d, k=-(dx - 1), dtype=jnp.float32)
            a = a + jnp.einsum("pq,io->piqo", shift, w[dy, dx])
        if not pooled:
            cols = a.reshape(d * cin, d * cout)
        else:
            even = a[:, :, 0::2, :]                       # (d, cin, d//2, cout)
            odd = a[:, :, 1::2, :]
            if c_major:
                even = even.transpose(0, 1, 3, 2)         # (d, cin, cout, d//2)
                odd = odd.transpose(0, 1, 3, 2)
            half = cout * (d // 2)
            cols = jnp.concatenate(
                [even.reshape(d * cin, half), odd.reshape(d * cin, half)],
                axis=1)
        bands.append(cols)
    wband = jnp.concatenate(bands, axis=0).astype(dtype)   # (3*d*cin, d*cout)

    if not pooled:
        bias_row = jnp.tile(b, d)
    else:
        half_bias = jnp.repeat(b, d // 2) if c_major else jnp.tile(b, d // 2)
        bias_row = jnp.concatenate([half_bias, half_bias])
    return wband, bias_row.reshape(1, -1).astype(jnp.float32)


# ---------------------------------------------------------------------------
# pallas_call wrapper for one conv (+ optional fused pool) layer
# ---------------------------------------------------------------------------
def _conv_layer(x, wband, bias_row, *, pooled, budget_bytes, vmem_limit_bytes,
                cap=512):
    """x: (B, T_in, D*Cin) -> (B, T_out, DCstore)."""
    bsz, t_in, dc_in = x.shape
    dc_conv = wband.shape[1]
    rpo = 2 if pooled else 1
    t_out = t_in // 2 if pooled else t_in
    dc_store = dc_conv // 2 if pooled else dc_conv
    act_bytes = jnp.dtype(x.dtype).itemsize

    t_tile = _pick_row_tile(t_out, rpo, dc_in, dc_conv, dc_store, act_bytes,
                            cap, budget_bytes)
    rows_in = t_tile * rpo
    n_t = t_out // t_tile
    assert t_out % t_tile == 0
    assert rows_in % 8 == 0 or rows_in == t_in

    bpt = max(rows_in // 8, 1)            # 8-row halo blocks per time tile
    nb_t = (t_in + 7) // 8                # number of 8-row blocks along T_in

    kernel = functools.partial(_conv_band_kernel,
                               rows_in=rows_in, pooled=pooled)

    return pl.pallas_call(
        kernel,
        out_shape=jax.ShapeDtypeStruct((bsz, t_out, dc_store), x.dtype),
        grid_spec=pltpu.PrefetchScalarGridSpec(
            num_scalar_prefetch=0,
            grid=(bsz, n_t),
            in_specs=[
                # main rows of this tile
                pl.BlockSpec((1, rows_in, dc_in), lambda b, i: (b, i, 0)),
                # aligned 8-row block ending at the halo row above (clamped;
                # the halo value is zeroed in-kernel at i == 0)
                pl.BlockSpec((1, 8, dc_in),
                             lambda b, i: (b, jnp.maximum(i * bpt - 1, 0), 0)),
                # aligned 8-row block starting at the halo row below (clamped;
                # zeroed in-kernel for the last tile)
                pl.BlockSpec((1, 8, dc_in),
                             lambda b, i: (b, jnp.minimum(i * bpt + bpt,
                                                          nb_t - 1), 0)),
                # K-folded band weights + bias (grid-invariant)
                pl.BlockSpec((3 * dc_in, dc_conv), lambda b, i: (0, 0)),
                pl.BlockSpec((1, dc_conv), lambda b, i: (0, 0)),
            ],
            out_specs=pl.BlockSpec((1, t_tile, dc_store),
                                   lambda b, i: (b, i, 0)),
        ),
        compiler_params=pltpu.CompilerParams(
            dimension_semantics=("parallel", "parallel"),
            vmem_limit_bytes=vmem_limit_bytes),
    )(x, x, x, wband, bias_row)


# ---------------------------------------------------------------------------
# LengthAwareWrapper length arithmetic
# ---------------------------------------------------------------------------
def _length_after(lengths, kernel_size, stride, padding, dilation=1):
    lf = (lengths.astype(jnp.float32) + 2 * padding
          - dilation * (kernel_size - 1) - 1) / stride + 1.0
    return jnp.floor(jnp.maximum(lf, 1.0)).astype(lengths.dtype)


# ---------------------------------------------------------------------------
# VGGExtractor
# ---------------------------------------------------------------------------
class VGGExtractorPallas:
    def __init__(self, in_channel, out_channel, key):
        assert in_channel == 1, "forward() unsqueezes a single input channel"
        self.in_channel = in_channel
        self.out_channel = out_channel
        hc = out_channel // 2
        ks = jax.random.split(key, 8)

        def conv_init(kw, kb, cin, cout):
            # PyTorch-style uniform bound 1/sqrt(fan_in)
            bound = 1.0 / float(jnp.sqrt(jnp.float32(cin * 9)))
            w = jax.random.uniform(kw, (3, 3, cin, cout), jnp.float32,
                                   -bound, bound)
            b = jax.random.uniform(kb, (cout,), jnp.float32, -bound, bound)
            return w, b

        self.w1, self.b1 = conv_init(ks[0], ks[1], in_channel, hc)
        self.w2, self.b2 = conv_init(ks[2], ks[3], hc, hc)
        self.w3, self.b3 = conv_init(ks[4], ks[5], hc, out_channel)
        self.w4, self.b4 = conv_init(ks[6], ks[7], out_channel, out_channel)

    def __call__(self, feature, lengths, compute_dtype=jnp.bfloat16):
        # feature: (B, T, D) float32; lengths: (B,) int32
        B, T, D = feature.shape
        # TODO(synk): support odd/ragged T and D via MaxPool2d floor-cropping;
        # asserted away here to keep block shapes aligned.
        assert T % 16 == 0 and D % 4 == 0, "T % 16 == 0 and D % 4 == 0 required"
        D2 = D // 2
        budget, limit = _vmem_params()

        w1b, b1r = _band_weights_and_bias(self.w1, self.b1, D, pooled=False,
                                          c_major=False, dtype=compute_dtype)
        w2b, b2r = _band_weights_and_bias(self.w2, self.b2, D, pooled=True,
                                          c_major=False, dtype=compute_dtype)
        w3b, b3r = _band_weights_and_bias(self.w3, self.b3, D2, pooled=False,
                                          c_major=False, dtype=compute_dtype)
        w4b, b4r = _band_weights_and_bias(self.w4, self.b4, D2, pooled=True,
                                          c_major=True, dtype=compute_dtype)

        x = feature.astype(compute_dtype)             # (B, T, D*1) lane-dense
        x = _conv_layer(x, w1b, b1r, pooled=False,
                        budget_bytes=budget, vmem_limit_bytes=limit)
        lengths = _length_after(lengths, 3, 1, 1)
        x = _conv_layer(x, w2b, b2r, pooled=True,
                        budget_bytes=budget, vmem_limit_bytes=limit)
        lengths = _length_after(lengths, 3, 1, 1)
        lengths = _length_after(lengths, 2, 2, 0)
        x = _conv_layer(x, w3b, b3r, pooled=False,
                        budget_bytes=budget, vmem_limit_bytes=limit)
        lengths = _length_after(lengths, 3, 1, 1)
        x = _conv_layer(x, w4b, b4r, pooled=True,
                        budget_bytes=budget, vmem_limit_bytes=limit)
        lengths = _length_after(lengths, 3, 1, 1)
        lengths = _length_after(lengths, 2, 2, 0)
        # conv4 already wrote (B, T//4, out_channel * D//4) with channel-major
        # lanes == the module's transpose(1,2)+reshape output. Nothing to do.
        return x, lengths


# ---------------------------------------------------------------------------
# Pure-JAX reference for the correctness check
# ---------------------------------------------------------------------------
def _ref_forward(model, feature, lengths):
    hp = jax.lax.Precision.HIGHEST

    def conv(x, w, b):
        y = jax.lax.conv_general_dilated(
            x, w, window_strides=(1, 1), padding="SAME",
            dimension_numbers=("NHWC", "HWIO", "NHWC"), precision=hp)
        return jax.nn.relu(y + b[None, None, None, :])

    def pool(x):
        return jax.lax.reduce_window(
            x, -jnp.inf, jax.lax.max, (1, 2, 2, 1), (1, 2, 2, 1), "VALID")

    B, _, _ = feature.shape
    x = feature[:, :, :, None]
    x = conv(x, model.w1, model.b1)
    lengths = _length_after(lengths, 3, 1, 1)
    x = conv(x, model.w2, model.b2)
    lengths = _length_after(lengths, 3, 1, 1)
    x = pool(x)
    lengths = _length_after(lengths, 2, 2, 0)
    x = conv(x, model.w3, model.b3)
    lengths = _length_after(lengths, 3, 1, 1)
    x = conv(x, model.w4, model.b4)
    lengths = _length_after(lengths, 3, 1, 1)
    x = pool(x)
    lengths = _length_after(lengths, 2, 2, 0)
    x = jnp.transpose(x, (0, 1, 3, 2))            # (B, T4, C, D4)
    x = x.reshape(B, x.shape[1], -1)
    return x, lengths


if __name__ == "__main__":
    key = jax.random.PRNGKey(0)
    k_feat, k_model = jax.random.split(key)

    # Small but tiling-exercising shapes.
    B, T, D = 2, 512, 16
    in_channel, out_channel = 1, 8

    feature = jax.random.normal(k_feat, (B, T, D), jnp.float32)
    lengths = jnp.array([512, 300], dtype=jnp.int32)

    model = VGGExtractorPallas(in_channel, out_channel, k_model)
    ref_out, ref_lengths = _ref_forward(model, feature, lengths)

    # f32 pass: tight numerical check against the pure-JAX reference.
    out32, len32 = model(feature, lengths, compute_dtype=jnp.float32)
    out32 = jax.block_until_ready(out32)
    len32 = jax.block_until_ready(len32)
    assert out32.shape == (B, T // 4, D * out_channel // 4), out32.shape
    err32 = float(jnp.max(jnp.abs(out32 - ref_out)))
    assert jnp.allclose(out32, ref_out, atol=1e-3, rtol=1e-3), \
        f"f32 output mismatch, max abs err = {err32}"
    assert jnp.array_equal(len32, ref_lengths), "length mismatch (f32)"

    # bf16 pass (production setting): f32 accumulation, looser tolerance.
    out16, len16 = model(feature, lengths, compute_dtype=jnp.bfloat16)
    out16 = jax.block_until_ready(out16).astype(jnp.float32)
    len16 = jax.block_until_ready(len16)
    err16 = float(jnp.max(jnp.abs(out16 - ref_out)))
    assert jnp.allclose(out16, ref_out, atol=1e-1, rtol=1e-1), \
        f"bf16 output mismatch, max abs err = {err16}"
    assert jnp.array_equal(len16, ref_lengths), "length mismatch (bf16)"

    print("KERNEL_OK")
</pallas_src>

<mosaic_0001>
module attributes {stable_mosaic.version = 11 : i64} {
  func.func @_conv_band_kernel(%arg0: i32, %arg1: i32, %arg2: memref<1x512x16xf32, #tpu.memory_space<vmem>>, %arg3: memref<1x8x16xf32, #tpu.memory_space<vmem>>, %arg4: memref<1x8x16xf32, #tpu.memory_space<vmem>>, %arg5: memref<48x64xf32, #tpu.memory_space<vmem>>, %arg6: memref<1x64xf32, #tpu.memory_space<vmem>>, %arg7: memref<1x512x64xf32, #tpu.memory_space<vmem>>) attributes {dimension_semantics = [#tpu.dimension_semantics<parallel>, #tpu.dimension_semantics<parallel>], iteration_bounds = array<i64: 2, 1>, scalar_prefetch = 0 : i64, scratch_operands = 0 : i64, tpu.core_type = #tpu.core_type<tc>, window_params = [{transform_indices = @transform_0, window_bounds = array<i64: 1, 512, 16>}, {transform_indices = @transform_1, window_bounds = array<i64: 1, 8, 16>}, {transform_indices = @transform_2, window_bounds = array<i64: 1, 8, 16>}, {pipeline_mode = #tpu.pipeline_mode<synchronous>, transform_indices = @transform_3, window_bounds = array<i64: 48, 64>}, {pipeline_mode = #tpu.pipeline_mode<synchronous>, transform_indices = @transform_4, window_bounds = array<i64: 1, 64>}, {transform_indices = @transform_5, window_bounds = array<i64: 1, 512, 64>}]} {
    %c0 = arith.constant 0 : index
    %c0_0 = arith.constant 0 : index
    %c0_1 = arith.constant 0 : index
    %0 = vector.load %arg2[%c0, %c0_0, %c0_1] : memref<1x512x16xf32, #tpu.memory_space<vmem>>, vector<1x512x16xf32>
    %1 = vector.shape_cast %0 : vector<1x512x16xf32> to vector<512x16xf32>
    %c0_2 = arith.constant 0 : index
    %c0_3 = arith.constant 0 : index
    %c0_4 = arith.constant 0 : index
    %2 = vector.load %arg3[%c0_2, %c0_3, %c0_4] : memref<1x8x16xf32, #tpu.memory_space<vmem>>, vector<1x8x16xf32>
    %3 = vector.shape_cast %2 : vector<1x8x16xf32> to vector<8x16xf32>
    %4 = vector.extract_strided_slice %3 {offsets = [7, 0], sizes = [1, 16], strides = [1, 1]} : vector<8x16xf32> to vector<1x16xf32>
    %c0_5 = arith.constant 0 : index
    %c0_6 = arith.constant 0 : index
    %c0_7 = arith.constant 0 : index
    %5 = vector.load %arg4[%c0_5, %c0_6, %c0_7] : memref<1x8x16xf32, #tpu.memory_space<vmem>>, vector<1x8x16xf32>
    %6 = vector.shape_cast %5 : vector<1x8x16xf32> to vector<8x16xf32>
    %7 = vector.extract_strided_slice %6 {offsets = [0, 0], sizes = [1, 16], strides = [1, 1]} : vector<8x16xf32> to vector<1x16xf32>
    %c0_i32 = arith.constant 0 : i32
    %8 = arith.cmpi eq, %arg1, %c0_i32 : i32
    %cst = arith.constant 0.000000e+00 : f32
    %9 = vector.broadcast %cst : f32 to vector<1x16xf32>
    %10 = arith.select %8, %9, %4 : vector<1x16xf32>
    %c0_i32_8 = arith.constant 0 : i32
    %11 = arith.cmpi eq, %arg1, %c0_i32_8 : i32
    %cst_9 = arith.constant 0.000000e+00 : f32
    %12 = vector.broadcast %cst_9 : f32 to vector<1x16xf32>
    %13 = arith.select %11, %12, %7 : vector<1x16xf32>
    %14 = tpu.concatenate %10, %1, %13 in 0 : vector<1x16xf32>, vector<512x16xf32>, vector<1x16xf32> -> vector<514x16xf32>
    %15 = vector.extract_strided_slice %14 {offsets = [0, 0], sizes = [512, 16], strides = [1, 1]} : vector<514x16xf32> to vector<512x16xf32>
    %16 = vector.extract_strided_slice %14 {offsets = [1, 0], sizes = [512, 16], strides = [1, 1]} : vector<514x16xf32> to vector<512x16xf32>
    %17 = vector.extract_strided_slice %14 {offsets = [2, 0], sizes = [512, 16], strides = [1, 1]} : vector<514x16xf32> to vector<512x16xf32>
    %18 = tpu.concatenate %15, %16, %17 in 1 : vector<512x16xf32>, vector<512x16xf32>, vector<512x16xf32> -> vector<512x48xf32>
    %c0_10 = arith.constant 0 : index
    %c0_11 = arith.constant 0 : index
    %19 = vector.load %arg5[%c0_10, %c0_11] : memref<48x64xf32, #tpu.memory_space<vmem>>, vector<48x64xf32>
    %cst_12 = arith.constant dense<0.000000e+00> : vector<512x64xf32>
    %20 = tpu.matmul %18, %19, %cst_12 {dimension_numbers = #tpu.dot_dimension_numbers<[1], [0], [0], [1], [0, 0, 1, 1], [], []>} : vector<512x48xf32>, vector<48x64xf32>, vector<512x64xf32> -> vector<512x64xf32>
    %c0_13 = arith.constant 0 : index
    %c0_14 = arith.constant 0 : index
    %21 = vector.load %arg6[%c0_13, %c0_14] : memref<1x64xf32, #tpu.memory_space<vmem>>, vector<1x64xf32>
    %22 = vector.shape_cast %21 : vector<1x64xf32> to vector<64xf32>
    %23 = vector.shape_cast %22 : vector<64xf32> to vector<1x64xf32>
    %24 = vector.broadcast %23 : vector<1x64xf32> to vector<512x64xf32>
    %25 = arith.addf %20, %24 : vector<512x64xf32>
    %cst_15 = arith.constant 0.000000e+00 : f32
    %26 = vector.broadcast %cst_15 : f32 to vector<512x64xf32>
    %27 = arith.maximumf %25, %26 : vector<512x64xf32>
    %c0_16 = arith.constant 0 : index
    %c0_17 = arith.constant 0 : index
    %c0_18 = arith.constant 0 : index
    %28 = vector.load %arg7[%c0_16, %c0_17, %c0_18] : memref<1x512x64xf32, #tpu.memory_space<vmem>>, vector<1x512x64xf32>
    %29 = vector.shape_cast %28 : vector<1x512x64xf32> to vector<512x64xf32>
    %30 = vector.shape_cast %27 : vector<512x64xf32> to vector<1x512x64xf32>
    tpu.vector_store %arg7[%c0_16, %c0_17, %c0_18], %30 {strides = array<i32>} : memref<1x512x64xf32, #tpu.memory_space<vmem>>, vector<1x512x64xf32>,
    return
  }
  func.func @transform_0(%arg0: i32, %arg1: i32) -> (i32, i32, i32) {
    %c0_i32 = arith.constant 0 : i32
    %c0_i32_0 = arith.constant 0 : i32
    return %arg0, %arg1, %c0_i32 : i32, i32, i32
  }
  func.func @transform_1(%arg0: i32, %arg1: i32) -> (i32, i32, i32) {
    %c64_i32 = arith.constant 64 : i32
    %0 = arith.muli %arg1, %c64_i32 : i32
    %c1_i32 = arith.constant 1 : i32
    %1 = arith.subi %0, %c1_i32 : i32
    %c0_i32 = arith.constant 0 : i32
    %2 = arith.maxsi %1, %c0_i32 : i32
    %c0_i32_0 = arith.constant 0 : i32
    %c0_i32_1 = arith.constant 0 : i32
    return %arg0, %2, %c0_i32_0 : i32, i32, i32
  }
  func.func @transform_2(%arg0: i32, %arg1: i32) -> (i32, i32, i32) {
    %c64_i32 = arith.constant 64 : i32
    %0 = arith.muli %arg1, %c64_i32 : i32
    %c64_i32_0 = arith.constant 64 : i32
    %1 = arith.addi %0, %c64_i32_0 : i32
    %c63_i32 = arith.constant 63 : i32
    %2 = arith.minsi %1, %c63_i32 : i32
    %c0_i32 = arith.constant 0 : i32
    %c0_i32_1 = arith.constant 0 : i32
    return %arg0, %2, %c0_i32 : i32, i32, i32
  }
  func.func @transform_3(%arg0: i32, %arg1: i32) -> (i32, i32) {
    %c0_i32 = arith.constant 0 : i32
    %c0_i32_0 = arith.constant 0 : i32
    %c0_i32_1 = arith.constant 0 : i32
    return %c0_i32, %c0_i32_0 : i32, i32
  }
  func.func @transform_4(%arg0: i32, %arg1: i32) -> (i32, i32) {
    %c0_i32 = arith.constant 0 : i32
    %c0_i32_0 = arith.constant 0 : i32
    %c0_i32_1 = arith.constant 0 : i32
    return %c0_i32, %c0_i32_0 : i32, i32
  }
  func.func @transform_5(%arg0: i32, %arg1: i32) -> (i32, i32, i32) {
    %c0_i32 = arith.constant 0 : i32
    %c0_i32_0 = arith.constant 0 : i32
    return %arg0, %arg1, %c0_i32 : i32, i32, i32
  }
}

</mosaic_0001>

<llo_original>
// kernel: tpu_custom_call.1
$region0: #{tpu_custom_call.1}
  #allocation0 [shape = 'u32[]', space=smem, size = 0x4, offset = 0x4, fixed_abs, tag = 'smem constant byte address 0x4 - core index']
  #allocation1 [shape = 'u32[144,128]{1,0:T(1,128)}', space=vmem, size = 0x12000, scoped, tag = 'internal scratch']
  %s0 = inlined_call_operand.vmem [shape: f32[2,512,16], index: 0, kind: input, shape index: {}]
  %s1 = inlined_call_operand.vmem [shape: f32[2,512,16], index: 1, kind: input, shape index: {}]
  %s2 = inlined_call_operand.vmem [shape: f32[2,512,16], index: 2, kind: input, shape index: {}]
  %s3 = inlined_call_operand.vmem [shape: f32[48,64], index: 3, kind: input, shape index: {}]
  %s4 = inlined_call_operand.vmem [shape: f32[1,64], index: 4, kind: input, shape index: {}]
  %s5 = inlined_call_operand.vmem [shape: f32[2,512,64], index: 5, kind: output, shape index: {}]
  %s6 = sld [smem:[#allocation0]]
  $region53: #{tpu_custom_call.1} parent=0
    _
  %s8 = ssub.s32 1, %s6
  %s9 = scalar_select 0, %s8, %s6
  loop: start=0, step=1, limit=4
  $region2: #{tpu_custom_call.1} parent=0 // loop_pre_header
    _
  $region3: #{tpu_custom_call.1} parent=0 // loop_header
    %s11 = sphi 0, %s15
    %p12 = scmp.ge.s32.totalorder %s11, 4
    %s18 = sphi 0, %s30
    %s19 = sphi 0, %s26
    %s20 = sphi 0, %s18
    %s21 = sphi 0, %s19
    %s22 = sphi 0, %s20
    %s23 = sphi 0, %s21
    %s35 = sphi 0, %s37
    %s38 = sphi 0, %s35
    %s39 = sphi 0, %s38
    %s55 = sphi 0, %s39
    %s71 = sphi 0, %s73
    %s74 = sphi 0, %s71
    %s75 = sphi 0, %s74
    %s91 = sphi 0, %s75
    %s107 = sphi 0, %s109
    %s110 = sphi 0, %s107
    %s111 = sphi 0, %s110
    %s127 = sphi 0, %s111
    %s131 = sphi 0, %s131
    %s133 = sphi 0, %s131
    %s134 = sphi 0, %s133
    %s148 = sphi 0, %s134
    %s152 = sphi 0, %s152
    %s154 = sphi 0, %s152
    %s155 = sphi 0, %s154
    %s169 = sphi 0, %s155
    %s177 = sphi 0, %s179
    %s180 = sphi 0, %s177
    %s181 = sphi 0, %s180
    %s197 = sphi 0, %s181
  $region4: #{tpu_custom_call.1} parent=0 // loop_header_branch
    %14 = sbr.rel (%p12) target = $region8
  $region5: #{tpu_custom_call.1} parent=0 // loop_body
    %s16 = ssub.s32 %s11, 1
    %s17 = ssub.s32 %s11, 2
    %s24 = sadd.s32 1, %s19
    %p25 = scmp.ge.s32.totalorder %s24, 1
    %s26 = scalar_select %p25, 0, %s24
    %s27 = sadd.s32 1, %s18
    %s28 = scalar_select %p25, %s27, %s18
    %p29 = scmp.ge.s32.totalorder %s28, 2
    %s30 = scalar_select %p29, 0, %s28
    %s31 = ssub.s32 %s18, %s30
    %s32 = ssub.s32 %s19, %s26
    %s33 = sor.u32 %s31, %s32
    %p34 = scmp.eq.s32.totalorder %s33, 0
    %s36 = sadd.s32 %s35, 1
    %s37 = scalar_select %p34, %s35, %s36
    %p40 = pneg %p34
    %p41 = scmp.eq.s32.totalorder %s11, 1
    %p42 = por %p40, %p41
    %p43 = scmp.ne.s32.totalorder %s35, %s38
    %p44 = scmp.eq.s32.totalorder %s11, 0
    %p45 = por %p43, %p44
    %p46 = scmp.ne.s32.totalorder %s35, %s38
    %p47 = scmp.eq.s32.totalorder %s16, 1
    %p48 = por %p46, %p47
    %p49 = scmp.ne.s32.totalorder %s38, %s39
    %p50 = scmp.eq.s32.totalorder %s16, 0
    %p51 = por %p49, %p50
    %p52 = scmp.ne.s32.totalorder %s38, %s39
    %p53 = scmp.eq.s32.totalorder %s17, 1
    %p54 = por %p52, %p53
    %p56 = scmp.ne.s32.totalorder %s39, %s55
    %p57 = scmp.eq.s32.totalorder %s17, 0
    %p58 = por %p56, %p57
    %s59 = smul.u32 %s19, 64
    %s60 = ssub.s32 %s59, 1
    %p61 = scmp.gt.s32.totalorder %s60, 0
    %s62 = scalar_select %p61, %s60, 0
    %s63 = smul.u32 %s26, 64
    %s64 = ssub.s32 %s63, 1
    %p65 = scmp.gt.s32.totalorder %s64, 0
    %s66 = scalar_select %p65, %s64, 0
    %s67 = ssub.s32 %s18, %s30
    %s68 = ssub.s32 %s62, %s66
    %s69 = sor.u32 %s67, %s68
    %p70 = scmp.eq.s32.totalorder %s69, 0
    %s72 = sadd.s32 %s71, 1
    %s73 = scalar_select %p70, %s71, %s72
    %p76 = pneg %p70
    %p77 = scmp.eq.s32.totalorder %s11, 1
    %p78 = por %p76, %p77
    %p79 = scmp.ne.s32.totalorder %s71, %s74
    %p80 = scmp.eq.s32.totalorder %s11, 0
    %p81 = por %p79, %p80
    %p82 = scmp.ne.s32.totalorder %s71, %s74
    %p83 = scmp.eq.s32.totalorder %s16, 1
    %p84 = por %p82, %p83
    %p85 = scmp.ne.s32.totalorder %s74, %s75
    %p86 = scmp.eq.s32.totalorder %s16, 0
    %p87 = por %p85, %p86
    %p88 = scmp.ne.s32.totalorder %s74, %s75
    %p89 = scmp.eq.s32.totalorder %s17, 1
    %p90 = por %p88, %p89
    %p92 = scmp.ne.s32.totalorder %s75, %s91
    %p93 = scmp.eq.s32.totalorder %s17, 0
    %p94 = por %p92, %p93
    %s95 = smul.u32 %s19, 64
    %s96 = sadd.s32 %s95, 64
    %p97 = scmp.lt.s32.totalorder %s96, 63
    %s98 = scalar_select %p97, %s96, 63
    %s99 = smul.u32 %s26, 64
    %s100 = sadd.s32 %s99, 64
    %p101 = scmp.lt.s32.totalorder %s100, 63
    %s102 = scalar_select %p101, %s100, 63
    %s103 = ssub.s32 %s18, %s30
    %s104 = ssub.s32 %s98, %s102
    %s105 = sor.u32 %s103, %s104
    %p106 = scmp.eq.s32.totalorder %s105, 0
    %s108 = sadd.s32 %s107, 1
    %s109 = scalar_select %p106, %s107, %s108
    %p112 = pneg %p106
    %p113 = scmp.eq.s32.totalorder %s11, 1
    %p114 = por %p112, %p113
    %p115 = scmp.ne.s32.totalorder %s107, %s110
    %p116 = scmp.eq.s32.totalorder %s11, 0
    %p117 = por %p115, %p116
    %p118 = scmp.ne.s32.totalorder %s107, %s110
    %p119 = scmp.eq.s32.totalorder %s16, 1
    %p120 = por %p118, %p119
    %p121 = scmp.ne.s32.totalorder %s110, %s111
    %p122 = scmp.eq.s32.totalorder %s16, 0
    %p123 = por %p121, %p122
    %p124 = scmp.ne.s32.totalorder %s110, %s111
    %p125 = scmp.eq.s32.totalorder %s17, 1
    %p126 = por %p124, %p125
    %p128 = scmp.ne.s32.totalorder %s111, %s127
    %p129 = scmp.eq.s32.totalorder %s17, 0
    %p130 = por %p128, %p129
    %s132 = sadd.s32 %s131, 1
    %p135 = scmp.eq.s32.totalorder %s11, 1
    %p136 = scmp.ne.s32.totalorder %s131, %s133
    %p137 = scmp.eq.s32.totalorder %s11, 0
    %p138 = por %p136, %p137
    %p139 = scmp.ne.s32.totalorder %s131, %s133
    %p140 = scmp.eq.s32.totalorder %s16, 1
    %p141 = por %p139, %p140
    %p142 = scmp.ne.s32.totalorder %s133, %s134
    %p143 = scmp.eq.s32.totalorder %s16, 0
    %p144 = por %p142, %p143
    %p145 = scmp.ne.s32.totalorder %s133, %s134
    %p146 = scmp.eq.s32.totalorder %s17, 1
    %p147 = por %p145, %p146
    %p149 = scmp.ne.s32.totalorder %s134, %s148
    %p150 = scmp.eq.s32.totalorder %s17, 0
    %p151 = por %p149, %p150
    %s153 = sadd.s32 %s152, 1
    %p156 = scmp.eq.s32.totalorder %s11, 1
    %p157 = scmp.ne.s32.totalorder %s152, %s154
    %p158 = scmp.eq.s32.totalorder %s11, 0
    %p159 = por %p157, %p158
    %p160 = scmp.ne.s32.totalorder %s152, %s154
    %p161 = scmp.eq.s32.totalorder %s16, 1
    %p162 = por %p160, %p161
    %p163 = scmp.ne.s32.totalorder %s154, %s155
    %p164 = scmp.eq.s32.totalorder %s16, 0
    %p165 = por %p163, %p164
    %p166 = scmp.ne.s32.totalorder %s154, %s155
    %p167 = scmp.eq.s32.totalorder %s17, 1
    %p168 = por %p166, %p167
    %p170 = scmp.ne.s32.totalorder %s155, %s169
    %p171 = scmp.eq.s32.totalorder %s17, 0
    %p172 = por %p170, %p171
    %s173 = ssub.s32 %s18, %s30
    %s174 = ssub.s32 %s19, %s26
    %s175 = sor.u32 %s173, %s174
    %p176 = scmp.eq.s32.totalorder %s175, 0
    %s178 = sadd.s32 %s177, 1
    %s179 = scalar_select %p176, %s177, %s178
    %p182 = pneg %p176
    %p183 = scmp.eq.s32.totalorder %s11, 1
    %p184 = por %p182, %p183
    %p185 = scmp.ne.s32.totalorder %s177, %s180
    %p186 = scmp.eq.s32.totalorder %s11, 0
    %p187 = por %p185, %p186
    %p188 = scmp.ne.s32.totalorder %s177, %s180
    %p189 = scmp.eq.s32.totalorder %s16, 1
    %p190 = por %p188, %p189
    %p191 = scmp.ne.s32.totalorder %s180, %s181
    %p192 = scmp.eq.s32.totalorder %s16, 0
    %p193 = por %p191, %p192
    %p194 = scmp.ne.s32.totalorder %s180, %s181
    %p195 = scmp.eq.s32.totalorder %s17, 1
    %p196 = por %p194, %p195
    %p198 = scmp.ne.s32.totalorder %s181, %s197
    %p199 = scmp.eq.s32.totalorder %s17, 0
    %p200 = por %p198, %p199
    %p201 = scmp.le.s32.totalorder 1, %s11
    %p202 = scmp.lt.s32.totalorder %s11, 3
    %p203 = pnand %p201, %p202
    %p204 = pneg %p203
    // Predicated region
    $region9: #{tpu_custom_call.1} parent=5 // pred_check
      _
    $region10: #{tpu_custom_call.1} parent=5 // pred_check_branch
      %206 = sbr.rel (%p203) target = $region12
    $region11: #{tpu_custom_call.1} parent=5 // pred_region
      %s207 = ssub.s32 %s11, 1
      // Predicated region
      $region13: #{tpu_custom_call.1} parent=11 // pred_check
        %p208 = pneg %p144
      $region14: #{tpu_custom_call.1} parent=11 // pred_check_branch
        %210 = sbr.rel (%p208) target = $region16
      $region15: #{tpu_custom_call.1} parent=11 // pred_region
        _
      $region16: #{tpu_custom_call.1} parent=11 // pred_fallthru
        _
      // Predicated region
      $region17: #{tpu_custom_call.1} parent=11 // pred_check
        %p211 = pneg %p165
      $region18: #{tpu_custom_call.1} parent=11 // pred_check_branch
        %213 = sbr.rel (%p211) target = $region20
      $region19: #{tpu_custom_call.1} parent=11 // pred_region
        _
      $region20: #{tpu_custom_call.1} parent=11 // pred_fallthru
        _
    $region12: #{tpu_custom_call.1} parent=5 // pred_fallthru
      _
    %p214 = scmp.lt.s32.totalorder %s11, 2
    // Predicated region
    $region21: #{tpu_custom_call.1} parent=5 // pred_check
      %p215 = pneg %p214
    $region22: #{tpu_custom_call.1} parent=5 // pred_check_branch
      %217 = sbr.rel (%p215) target = $region24
    $region23: #{tpu_custom_call.1} parent=5 // pred_region
      // Predicated region
      $region25: #{tpu_custom_call.1} parent=23 // pred_check
        %p218 = pneg %p45
      $region26: #{tpu_custom_call.1} parent=23 // pred_check_branch
        %220 = sbr.rel (%p218) target = $region28
      $region27: #{tpu_custom_call.1} parent=23 // pred_region
        %s221 = smul.u32 64, %s19
        %p222 = scmp.lt.s32.totalorder %s18, 1
        %s223 = scalar_select %p222, %s18, 1
        %p224 = scmp.lt.s32.totalorder %s221, 63
        %s225 = scalar_select %p224, %s221, 63
        %s226 = smul.addr %s223, 64
        %s227 = sadd.s32 %s225, %s226
        %s228 = smul.addr %s227, 8
        %s229 = scalar_lea.vmem %s0, %s228
        %s230 = smul.u32 64, %s19
      $region28: #{tpu_custom_call.1} parent=23 // pred_fallthru
        _
      // Predicated region
      $region29: #{tpu_custom_call.1} parent=23 // pred_check
        %p231 = pneg %p81
      $region30: #{tpu_custom_call.1} parent=23 // pred_check_branch
        %233 = sbr.rel (%p231) target = $region32
      $region31: #{tpu_custom_call.1} parent=23 // pred_region
        %s234 = smul.u32 %s19, 64
        %s235 = ssub.s32 %s234, 1
        %p236 = scmp.gt.s32.totalorder %s235, 0
        %s237 = scalar_select %p236, %s235, 0
        %p238 = scmp.lt.s32.totalorder %s18, 1
        %s239 = scalar_select %p238, %s18, 1
        %p240 = scmp.lt.s32.totalorder %s237, 63
        %s241 = scalar_select %p240, %s237, 63
        %s242 = smul.addr %s239, 64
        %s243 = sadd.s32 %s241, %s242
        %s244 = smul.addr %s243, 8
        %s245 = scalar_lea.vmem %s1, %s244
        %s246 = smul.u32 %s19, 64
        %s247 = ssub.s32 %s246, 1
        %p248 = scmp.gt.s32.totalorder %s247, 0
        %s249 = scalar_select %p248, %s247, 0
      $region32: #{tpu_custom_call.1} parent=23 // pred_fallthru
        _
      // Predicated region
      $region33: #{tpu_custom_call.1} parent=23 // pred_check
        %p250 = pneg %p117
      $region34: #{tpu_custom_call.1} parent=23 // pred_check_branch
        %252 = sbr.rel (%p250) target = $region36
      $region35: #{tpu_custom_call.1} parent=23 // pred_region
        %s253 = smul.u32 %s19, 64
        %s254 = sadd.s32 %s253, 64
        %p255 = scmp.lt.s32.totalorder %s254, 63
        %s256 = scalar_select %p255, %s254, 63
        %p257 = scmp.lt.s32.totalorder %s18, 1
        %s258 = scalar_select %p257, %s18, 1
        %p259 = scmp.lt.s32.totalorder %s256, 63
        %s260 = scalar_select %p259, %s256, 63
        %s261 = smul.addr %s258, 64
        %s262 = sadd.s32 %s260, %s261
        %s263 = smul.addr %s262, 8
        %s264 = scalar_lea.vmem %s2, %s263
        %s265 = smul.u32 %s19, 64
        %s266 = sadd.s32 %s265, 64
        %p267 = scmp.lt.s32.totalorder %s266, 63
        %s268 = scalar_select %p267, %s266, 63
      $region36: #{tpu_custom_call.1} parent=23 // pred_fallthru
        _
    $region24: #{tpu_custom_call.1} parent=5 // pred_fallthru
      _
    %p269 = scmp.le.s32.totalorder 1, %s11
    %p270 = scmp.lt.s32.totalorder %s11, 3
    %p271 = pnand %p269, %p270
    %p272 = pneg %p271
    // Predicated region
    $region37: #{tpu_custom_call.1} parent=5 // pred_check
      _
    $region38: #{tpu_custom_call.1} parent=5 // pred_check_branch
      %274 = sbr.rel (%p271) target = $region40
    $region39: #{tpu_custom_call.1} parent=5 // pred_region
      %s275 = ssub.s32 %s11, 1
      %s276 = smul.u32 64, %s21
      %p277 = scmp.lt.s32.totalorder %s20, 1
      %s278 = scalar_select %p277, %s20, 1
      %p279 = scmp.lt.s32.totalorder %s276, 63
      %s280 = scalar_select %p279, %s276, 63
      %s281 = smul.addr %s278, 64
      %s282 = sadd.s32 %s280, %s281
      %s283 = smul.addr %s282, 8
      %s284 = scalar_lea.vmem %s0, %s283
      %p285 = pneg %p51
      %p286 = pneg %p48
      %s287 = smul.u32 %s21, 64
      %s288 = ssub.s32 %s287, 1
      %p289 = scmp.gt.s32.totalorder %s288, 0
      %s290 = scalar_select %p289, %s288, 0
      %p291 = scmp.lt.s32.totalorder %s20, 1
      %s292 = scalar_select %p291, %s20, 1
      %p293 = scmp.lt.s32.totalorder %s290, 63
      %s294 = scalar_select %p293, %s290, 63
      %s295 = smul.addr %s292, 64
      %s296 = sadd.s32 %s294, %s295
      %s297 = smul.addr %s296, 8
      %s298 = scalar_lea.vmem %s1, %s297
      %p299 = pneg %p87
      %p300 = pneg %p84
      %s301 = smul.u32 %s21, 64
      %s302 = sadd.s32 %s301, 64
      %p303 = scmp.lt.s32.totalorder %s302, 63
      %s304 = scalar_select %p303, %s302, 63
      %p305 = scmp.lt.s32.totalorder %s20, 1
      %s306 = scalar_select %p305, %s20, 1
      %p307 = scmp.lt.s32.totalorder %s304, 63
      %s308 = scalar_select %p307, %s304, 63
      %s309 = smul.addr %s306, 64
      %s310 = sadd.s32 %s308, %s309
      %s311 = smul.addr %s310, 8
      %s312 = scalar_lea.vmem %s2, %s311
      %p313 = pneg %p123
      %p314 = pneg %p120
      %p315 = pneg %p144
      %p316 = pneg %p141
      %p317 = pneg %p165
      %p318 = pneg %p162
      %p319 = pneg %p193
      %p320 = pneg %p190
      %s321 = smul.u32 64, %s21
      %p322 = scmp.lt.s32.totalorder %s20, 1
      %s323 = scalar_select %p322, %s20, 1
      %p324 = scmp.lt.s32.totalorder %s321, 63
      %s325 = scalar_select %p324, %s321, 63
      %s326 = smul.addr %s323, 64
      %s327 = sadd.s32 %s325, %s326
      %s328 = smul.addr %s327, 8
      %s329 = scalar_lea.vmem %s5, %s328
      %s330 = smul.u32 64, %s21
      %p331 = scmp.lt.s32.totalorder %s20, 1
      %s332 = scalar_select %p331, %s20, 1
      %p333 = scmp.lt.s32.totalorder %s330, 63
      %s334 = scalar_select %p333, %s330, 63
      %s335 = smul.addr %s332, 64
      %s336 = sadd.s32 %s334, %s335
      %s337 = smul.addr %s336, 8
      %s338 = scalar_lea.vmem %s0, %s337
      %s339 = smul.u32 64, %s21
      %s340 = smul.u32 %s21, 64
      %s341 = ssub.s32 %s340, 1
      %p342 = scmp.gt.s32.totalorder %s341, 0
      %s343 = scalar_select %p342, %s341, 0
      %p344 = scmp.lt.s32.totalorder %s20, 1
      %s345 = scalar_select %p344, %s20, 1
      %p346 = scmp.lt.s32.totalorder %s343, 63
      %s347 = scalar_select %p346, %s343, 63
      %s348 = smul.addr %s345, 64
      %s349 = sadd.s32 %s347, %s348
      %s350 = smul.addr %s349, 8
      %s351 = scalar_lea.vmem %s1, %s350
      %s352 = smul.u32 %s21, 64
      %s353 = ssub.s32 %s352, 1
      %p354 = scmp.gt.s32.totalorder %s353, 0
      %s355 = scalar_select %p354, %s353, 0
      %s356 = smul.u32 %s21, 64
      %s357 = sadd.s32 %s356, 64
      %p358 = scmp.lt.s32.totalorder %s357, 63
      %s359 = scalar_select %p358, %s357, 63
      %p360 = scmp.lt.s32.totalorder %s20, 1
      %s361 = scalar_select %p360, %s20, 1
      %p362 = scmp.lt.s32.totalorder %s359, 63
      %s363 = scalar_select %p362, %s359, 63
      %s364 = smul.addr %s361, 64
      %s365 = sadd.s32 %s363, %s364
      %s366 = smul.addr %s365, 8
      %s367 = scalar_lea.vmem %s2, %s366
      %s368 = smul.u32 %s21, 64
      %s369 = sadd.s32 %s368, 64
      %p370 = scmp.lt.s32.totalorder %s369, 63
      %s371 = scalar_select %p370, %s369, 63
      %s372 = smul.u32 64, %s21
      %p373 = scmp.lt.s32.totalorder %s20, 1
      %s374 = scalar_select %p373, %s20, 1
      %p375 = scmp.lt.s32.totalorder %s372, 63
      %s376 = scalar_select %p375, %s372, 63
      %s377 = smul.addr %s374, 64
      %s378 = sadd.s32 %s376, %s377
      %s379 = smul.addr %s378, 8
      %s380 = scalar_lea.vmem %s5, %s379
      %s381 = smul.u32 64, %s21
      %v382 = vld [vmem:[%s338] sm:$0xff]
      %v383 = vld [vmem:[%s338 + $0x8] sm:$0xff]
      %v384 = vld [vmem:[%s338 + $0x10] sm:$0xff]
      %v385 = vld [vmem:[%s338 + $0x18] sm:$0xff]
      %v386 = vld [vmem:[%s338 + $0x20] sm:$0xff]
      %v387 = vld [vmem:[%s338 + $0x28] sm:$0xff]
      %v388 = vld [vmem:[%s338 + $0x30] sm:$0xff]
      %v389 = vld [vmem:[%s338 + $0x38] sm:$0xff]
      %v390 = vld [vmem:[%s338 + $0x40] sm:$0xff]
      %v391 = vld [vmem:[%s338 + $0x48] sm:$0xff]
      %v392 = vld [vmem:[%s338 + $0x50] sm:$0xff]
      %v393 = vld [vmem:[%s338 + $0x58] sm:$0xff]
      %v394 = vld [vmem:[%s338 + $0x60] sm:$0xff]
      %v395 = vld [vmem:[%s338 + $0x68] sm:$0xff]
      %v396 = vld [vmem:[%s338 + $0x70] sm:$0xff]
      %v397 = vld [vmem:[%s338 + $0x78] sm:$0xff]
      %v398 = vld [vmem:[%s338 + $0x80] sm:$0xff]
      %v399 = vld [vmem:[%s338 + $0x88] sm:$0xff]
      %v400 = vld [vmem:[%s338 + $0x90] sm:$0xff]
      %v401 = vld [vmem:[%s338 + $0x98] sm:$0xff]
      %v402 = vld [vmem:[%s338 + $0xa0] sm:$0xff]
      %v403 = vld [vmem:[%s338 + $0xa8] sm:$0xff]
      %v404 = vld [vmem:[%s338 + $0xb0] sm:$0xff]
      %v405 = vld [vmem:[%s338 + $0xb8] sm:$0xff]
      %v406 = vld [vmem:[%s338 + $0xc0] sm:$0xff]
      %v407 = vld [vmem:[%s338 + $0xc8] sm:$0xff]
      %v408 = vld [vmem:[%s338 + $0xd0] sm:$0xff]
      %v409 = vld [vmem:[%s338 + $0xd8] sm:$0xff]
      %v410 = vld [vmem:[%s338 + $0xe0] sm:$0xff]
      %v411 = vld [vmem:[%s338 + $0xe8] sm:$0xff]
      %v412 = vld [vmem:[%s338 + $0xf0] sm:$0xff]
      %v413 = vld [vmem:[%s338 + $0xf8] sm:$0xff]
      %v414 = vld [vmem:[%s338 + $0x100] sm:$0xff]
      %v415 = vld [vmem:[%s338 + $0x108] sm:$0xff]
      %v416 = vld [vmem:[%s338 + $0x110] sm:$0xff]
      %v417 = vld [vmem:[%s338 + $0x118] sm:$0xff]
      %v418 = vld [vmem:[%s338 + $0x120] sm:$0xff]
      %v419 = vld [vmem:[%s338 + $0x128] sm:$0xff]
      %v420 = vld [vmem:[%s338 + $0x130] sm:$0xff]
      %v421 = vld [vmem:[%s338 + $0x138] sm:$0xff]
      %v422 = vld [vmem:[%s338 + $0x140] sm:$0xff]
      %v423 = vld [vmem:[%s338 + $0x148] sm:$0xff]
      %v424 = vld [vmem:[%s338 + $0x150] sm:$0xff]
      %v425 = vld [vmem:[%s338 + $0x158] sm:$0xff]
      %v426 = vld [vmem:[%s338 + $0x160] sm:$0xff]
      %v427 = vld [vmem:[%s338 + $0x168] sm:$0xff]
      %v428 = vld [vmem:[%s338 + $0x170] sm:$0xff]
      %v429 = vld [vmem:[%s338 + $0x178] sm:$0xff]
      %v430 = vld [vmem:[%s338 + $0x180] sm:$0xff]
      %v431 = vld [vmem:[%s338 + $0x188] sm:$0xff]
      %v432 = vld [vmem:[%s338 + $0x190] sm:$0xff]
      %v433 = vld [vmem:[%s338 + $0x198] sm:$0xff]
      %v434 = vld [vmem:[%s338 + $0x1a0] sm:$0xff]
      %v435 = vld [vmem:[%s338 + $0x1a8] sm:$0xff]
      %v436 = vld [vmem:[%s338 + $0x1b0] sm:$0xff]
      %v437 = vld [vmem:[%s338 + $0x1b8] sm:$0xff]
      %v438 = vld [vmem:[%s338 + $0x1c0] sm:$0xff]
      %v439 = vld [vmem:[%s338 + $0x1c8] sm:$0xff]
      %v440 = vld [vmem:[%s338 + $0x1d0] sm:$0xff]
      %v441 = vld [vmem:[%s338 + $0x1d8] sm:$0xff]
      %v442 = vld [vmem:[%s338 + $0x1e0] sm:$0xff]
      %v443 = vld [vmem:[%s338 + $0x1e8] sm:$0xff]
      %v444 = vld [vmem:[%s338 + $0x1f0] sm:$0xff]
      %v445 = vld [vmem:[%s338 + $0x1f8] sm:$0xff]
      %v446 = vld [vmem:[%s351] sm:$0xff]
      %v447 = vld [vmem:[%s367] sm:$0xff]
      %p448 = scmp.eq.s32.totalorder %s21, 0
      %s449 = scalar_select %p448, 1, 0
      %v450 = vstv %s449
      %vm451 = vcmp.eq.s32.totalorder %v450, 1
      %v452 = vsel %vm451, 0.0, %v446
      %v453 = vsel %vm451, 0.0, %v447
      %v455 = vrot.slane %v452, 7
      %vm521 = vcmask 1040384
      %v522 = vrot.slane %v382, 7
      %v523 = vrot.slane %v383, 7
      %v524 = vsel %vm521, %v522, %v523
      %v525 = vrot.slane %v384, 7
      %v526 = vsel %vm521, %v523, %v525
      %v527 = vrot.slane %v385, 7
      %v528 = vsel %vm521, %v525, %v527
      %v529 = vrot.slane %v386, 7
      %v530 = vsel %vm521, %v527, %v529
      %v531 = vrot.slane %v387, 7
      %v532 = vsel %vm521, %v529, %v531
      %v533 = vrot.slane %v388, 7
      %v534 = vsel %vm521, %v531, %v533
      %v535 = vrot.slane %v389, 7
      %v536 = vsel %vm521, %v533, %v535
      %v537 = vrot.slane %v390, 7
      %v538 = vsel %vm521, %v535, %v537
      %v539 = vrot.slane %v391, 7
      %v540 = vsel %vm521, %v537, %v539
      %v541 = vrot.slane %v392, 7
      %v542 = vsel %vm521, %v539, %v541
      %v543 = vrot.slane %v393, 7
      %v544 = vsel %vm521, %v541, %v543
      %v545 = vrot.slane %v394, 7
      %v546 = vsel %vm521, %v543, %v545
      %v547 = vrot.slane %v395, 7
      %v548 = vsel %vm521, %v545, %v547
      %v549 = vrot.slane %v396, 7
      %v550 = vsel %vm521, %v547, %v549
      %v551 = vrot.slane %v397, 7
      %v552 = vsel %vm521, %v549, %v551
      %v553 = vrot.slane %v398, 7
      %v554 = vsel %vm521, %v551, %v553
      %v555 = vrot.slane %v399, 7
      %v556 = vsel %vm521, %v553, %v555
      %v557 = vrot.slane %v400, 7
      %v558 = vsel %vm521, %v555, %v557
      %v559 = vrot.slane %v401, 7
      %v560 = vsel %vm521, %v557, %v559
      %v561 = vrot.slane %v402, 7
      %v562 = vsel %vm521, %v559, %v561
      %v563 = vrot.slane %v403, 7
      %v564 = vsel %vm521, %v561, %v563
      %v565 = vrot.slane %v404, 7
      %v566 = vsel %vm521, %v563, %v565
      %v567 = vrot.slane %v405, 7
      %v568 = vsel %vm521, %v565, %v567
      %v569 = vrot.slane %v406, 7
      %v570 = vsel %vm521, %v567, %v569
      %v571 = vrot.slane %v407, 7
      %v572 = vsel %vm521, %v569, %v571
      %v573 = vrot.slane %v408, 7
      %v574 = vsel %vm521, %v571, %v573
      %v575 = vrot.slane %v409, 7
      %v576 = vsel %vm521, %v573, %v575
      %v577 = vrot.slane %v410, 7
      %v578 = vsel %vm521, %v575, %v577
      %v579 = vrot.slane %v411, 7
      %v580 = vsel %vm521, %v577, %v579
      %v581 = vrot.slane %v412, 7
      %v582 = vsel %vm521, %v579, %v581
      %v583 = vrot.slane %v413, 7
      %v584 = vsel %vm521, %v581, %v583
      %v585 = vrot.slane %v414, 7
      %v586 = vsel %vm521, %v583, %v585
      %v587 = vrot.slane %v415, 7
      %v588 = vsel %vm521, %v585, %v587
      %v589 = vrot.slane %v416, 7
      %v590 = vsel %vm521, %v587, %v589
      %v591 = vrot.slane %v417, 7
      %v592 = vsel %vm521, %v589, %v591
      %v593 = vrot.slane %v418, 7
      %v594 = vsel %vm521, %v591, %v593
      %v595 = vrot.slane %v419, 7
      %v596 = vsel %vm521, %v593, %v595
      %v597 = vrot.slane %v420, 7
      %v598 = vsel %vm521, %v595, %v597
      %v599 = vrot.slane %v421, 7
      %v600 = vsel %vm521, %v597, %v599
      %v601 = vrot.slane %v422, 7
      %v602 = vsel %vm521, %v599, %v601
      %v603 = vrot.slane %v423, 7
      %v604 = vsel %vm521, %v601, %v603
      %v605 = vrot.slane %v424, 7
      %v606 = vsel %vm521, %v603, %v605
      %v607 = vrot.slane %v425, 7
      %v608 = vsel %vm521, %v605, %v607
      %v609 = vrot.slane %v426, 7
      %v610 = vsel %vm521, %v607, %v609
      %v611 = vrot.slane %v427, 7
      %v612 = vsel %vm521, %v609, %v611
      %v613 = vrot.slane %v428, 7
      %v614 = vsel %vm521, %v611, %v613
      %v615 = vrot.slane %v429, 7
      %v616 = vsel %vm521, %v613, %v615
      %v617 = vrot.slane %v430, 7
      %v618 = vsel %vm521, %v615, %v617
      %v619 = vrot.slane %v431, 7
      %v620 = vsel %vm521, %v617, %v619
      %v621 = vrot.slane %v432, 7
      %v622 = vsel %vm521, %v619, %v621
      %v623 = vrot.slane %v433, 7
      %v624 = vsel %vm521, %v621, %v623
      %v625 = vrot.slane %v434, 7
      %v626 = vsel %vm521, %v623, %v625
      %v627 = vrot.slane %v435, 7
      %v628 = vsel %vm521, %v625, %v627
      %v629 = vrot.slane %v436, 7
      %v630 = vsel %vm521, %v627, %v629
      %v631 = vrot.slane %v437, 7
      %v632 = vsel %vm521, %v629, %v631
      %v633 = vrot.slane %v438, 7
      %v634 = vsel %vm521, %v631, %v633
      %v635 = vrot.slane %v439, 7
      %v636 = vsel %vm521, %v633, %v635
      %v637 = vrot.slane %v440, 7
      %v638 = vsel %vm521, %v635, %v637
      %v639 = vrot.slane %v441, 7
      %v640 = vsel %vm521, %v637, %v639
      %v641 = vrot.slane %v442, 7
      %v642 = vsel %vm521, %v639, %v641
      %v643 = vrot.slane %v443, 7
      %v644 = vsel %vm521, %v641, %v643
      %v645 = vrot.slane %v444, 7
      %v646 = vsel %vm521, %v643, %v645
      %v647 = vrot.slane %v445, 7
      %v648 = vsel %vm521, %v645, %v647
      %v715 = vrot.slane %v453, 7
      %v717 = vsel %vm521, %v455, %v522
      %v718 = vsel %vm521, %v647, %v715
      %vm721 = vcmask 1046528
      %v722 = vrot.slane %v717, 1
      %v723 = vrot.slane %v524, 1
      %v724 = vsel %vm721, %v722, %v723
      %v725 = vrot.slane %v526, 1
      %v726 = vsel %vm721, %v723, %v725
      %v727 = vrot.slane %v528, 1
      %v728 = vsel %vm721, %v725, %v727
      %v729 = vrot.slane %v530, 1
      %v730 = vsel %vm721, %v727, %v729
      %v731 = vrot.slane %v532, 1
      %v732 = vsel %vm721, %v729, %v731
      %v733 = vrot.slane %v534, 1
      %v734 = vsel %vm721, %v731, %v733
      %v735 = vrot.slane %v536, 1
      %v736 = vsel %vm721, %v733, %v735
      %v737 = vrot.slane %v538, 1
      %v738 = vsel %vm721, %v735, %v737
      %v739 = vrot.slane %v540, 1
      %v740 = vsel %vm721, %v737, %v739
      %v741 = vrot.slane %v542, 1
      %v742 = vsel %vm721, %v739, %v741
      %v743 = vrot.slane %v544, 1
      %v744 = vsel %vm721, %v741, %v743
      %v745 = vrot.slane %v546, 1
      %v746 = vsel %vm721, %v743, %v745
      %v747 = vrot.slane %v548, 1
      %v748 = vsel %vm721, %v745, %v747
      %v749 = vrot.slane %v550, 1
      %v750 = vsel %vm721, %v747, %v749
      %v751 = vrot.slane %v552, 1
      %v752 = vsel %vm721, %v749, %v751
      %v753 = vrot.slane %v554, 1
      %v754 = vsel %vm721, %v751, %v753
      %v755 = vrot.slane %v556, 1
      %v756 = vsel %vm721, %v753, %v755
      %v757 = vrot.slane %v558, 1
      %v758 = vsel %vm721, %v755, %v757
      %v759 = vrot.slane %v560, 1
      %v760 = vsel %vm721, %v757, %v759
      %v761 = vrot.slane %v562, 1
      %v762 = vsel %vm721, %v759, %v761
      %v763 = vrot.slane %v564, 1
      %v764 = vsel %vm721, %v761, %v763
      %v765 = vrot.slane %v566, 1
      %v766 = vsel %vm721, %v763, %v765
      %v767 = vrot.slane %v568, 1
      %v768 = vsel %vm721, %v765, %v767
      %v769 = vrot.slane %v570, 1
      %v770 = vsel %vm721, %v767, %v769
      %v771 = vrot.slane %v572, 1
      %v772 = vsel %vm721, %v769, %v771
      %v773 = vrot.slane %v574, 1
      %v774 = vsel %vm721, %v771, %v773
      %v775 = vrot.slane %v576, 1
      %v776 = vsel %vm721, %v773, %v775
      %v777 = vrot.slane %v578, 1
      %v778 = vsel %vm721, %v775, %v777
      %v779 = vrot.slane %v580, 1
      %v780 = vsel %vm721, %v777, %v779
      %v781 = vrot.slane %v582, 1
      %v782 = vsel %vm721, %v779, %v781
      %v783 = vrot.slane %v584, 1
      %v784 = vsel %vm721, %v781, %v783
      %v785 = vrot.slane %v586, 1
      %v786 = vsel %vm721, %v783, %v785
      %v787 = vrot.slane %v588, 1
      %v788 = vsel %vm721, %v785, %v787
      %v789 = vrot.slane %v590, 1
      %v790 = vsel %vm721, %v787, %v789
      %v791 = vrot.slane %v592, 1
      %v792 = vsel %vm721, %v789, %v791
      %v793 = vrot.slane %v594, 1
      %v794 = vsel %vm721, %v791, %v793
      %v795 = vrot.slane %v596, 1
      %v796 = vsel %vm721, %v793, %v795
      %v797 = vrot.slane %v598, 1
      %v798 = vsel %vm721, %v795, %v797
      %v799 = vrot.slane %v600, 1
      %v800 = vsel %vm721, %v797, %v799
      %v801 = vrot.slane %v602, 1
      %v802 = vsel %vm721, %v799, %v801
      %v803 = vrot.slane %v604, 1
      %v804 = vsel %vm721, %v801, %v803
      %v805 = vrot.slane %v606, 1
      %v806 = vsel %vm721, %v803, %v805
      %v807 = vrot.slane %v608, 1
      %v808 = vsel %vm721, %v805, %v807
      %v809 = vrot.slane %v610, 1
      %v810 = vsel %vm721, %v807, %v809
      %v811 = vrot.slane %v612, 1
      %v812 = vsel %vm721, %v809, %v811
      %v813 = vrot.slane %v614, 1
      %v814 = vsel %vm721, %v811, %v813
      %v815 = vrot.slane %v616, 1
      %v816 = vsel %vm721, %v813, %v815
      %v817 = vrot.slane %v618, 1
      %v818 = vsel %vm721, %v815, %v817
      %v819 = vrot.slane %v620, 1
      %v820 = vsel %vm721, %v817, %v819
      %v821 = vrot.slane %v622, 1
      %v822 = vsel %vm721, %v819, %v821
      %v823 = vrot.slane %v624, 1
      %v824 = vsel %vm721, %v821, %v823
      %v825 = vrot.slane %v626, 1
      %v826 = vsel %vm721, %v823, %v825
      %v827 = vrot.slane %v628, 1
      %v828 = vsel %vm721, %v825, %v827
      %v829 = vrot.slane %v630, 1
      %v830 = vsel %vm721, %v827, %v829
      %v831 = vrot.slane %v632, 1
      %v832 = vsel %vm721, %v829, %v831
      %v833 = vrot.slane %v634, 1
      %v834 = vsel %vm721, %v831, %v833
      %v835 = vrot.slane %v636, 1
      %v836 = vsel %vm721, %v833, %v835
      %v837 = vrot.slane %v638, 1
      %v838 = vsel %vm721, %v835, %v837
      %v839 = vrot.slane %v640, 1
      %v840 = vsel %vm721, %v837, %v839
      %v841 = vrot.slane %v642, 1
      %v842 = vsel %vm721, %v839, %v841
      %v843 = vrot.slane %v644, 1
      %v844 = vsel %vm721, %v841, %v843
      %v845 = vrot.slane %v646, 1
      %v846 = vsel %vm721, %v843, %v845
      %v847 = vrot.slane %v648, 1
      %v848 = vsel %vm721, %v845, %v847
      %v849 = vrot.slane %v718, 1
      %v850 = vsel %vm721, %v847, %v849
      %851 = vrot.lane.b32.xlu0 %v724, 16
      %v852 = vpop.permute.xlu0 %851
      %853 = vrot.lane.b32.xlu0 %v726, 16
      %v854 = vpop.permute.xlu0 %853
      %855 = vrot.lane.b32.xlu0 %v728, 16
      %v856 = vpop.permute.xlu0 %855
      %857 = vrot.lane.b32.xlu0 %v730, 16
      %v858 = vpop.permute.xlu0 %857
      %859 = vrot.lane.b32.xlu0 %v732, 16
      %v860 = vpop.permute.xlu0 %859
      %861 = vrot.lane.b32.xlu0 %v734, 16
      %v862 = vpop.permute.xlu0 %861
      %863 = vrot.lane.b32.xlu0 %v736, 16
      %v864 = vpop.permute.xlu0 %863
      %865 = vrot.lane.b32.xlu0 %v738, 16
      %v866 = vpop.permute.xlu0 %865
      %867 = vrot.lane.b32.xlu0 %v740, 16
      %v868 = vpop.permute.xlu0 %867
      %869 = vrot.lane.b32.xlu0 %v742, 16
      %v870 = vpop.permute.xlu0 %869
      %871 = vrot.lane.b32.xlu0 %v744, 16
      %v872 = vpop.permute.xlu0 %871
      %873 = vrot.lane.b32.xlu0 %v746, 16
      %v874 = vpop.permute.xlu0 %873
      %875 = vrot.lane.b32.xlu0 %v748, 16
      %v876 = vpop.permute.xlu0 %875
      %877 = vrot.lane.b32.xlu0 %v750, 16
      %v878 = vpop.permute.xlu0 %877
      %879 = vrot.lane.b32.xlu0 %v752, 16
      %v880 = vpop.permute.xlu0 %879
      %881 = vrot.lane.b32.xlu0 %v754, 16
      %v882 = vpop.permute.xlu0 %881
      %883 = vrot.lane.b32.xlu0 %v756, 16
      %v884 = vpop.permute.xlu0 %883
      %885 = vrot.lane.b32.xlu0 %v758, 16
      %v886 = vpop.permute.xlu0 %885
      %887 = vrot.lane.b32.xlu0 %v760, 16
      %v888 = vpop.permute.xlu0 %887
      %889 = vrot.lane.b32.xlu0 %v762, 16
      %v890 = vpop.permute.xlu0 %889
      %891 = vrot.lane.b32.xlu0 %v764, 16
      %v892 = vpop.permute.xlu0 %891
      %893 = vrot.lane.b32.xlu0 %v766, 16
      %v894 = vpop.permute.xlu0 %893
      %895 = vrot.lane.b32.xlu0 %v768, 16
      %v896 = vpop.permute.xlu0 %895
      %897 = vrot.lane.b32.xlu0 %v770, 16
      %v898 = vpop.permute.xlu0 %897
      %899 = vrot.lane.b32.xlu0 %v772, 16
      %v900 = vpop.permute.xlu0 %899
      %901 = vrot.lane.b32.xlu0 %v774, 16
      %v902 = vpop.permute.xlu0 %901
      %903 = vrot.lane.b32.xlu0 %v776, 16
      %v904 = vpop.permute.xlu0 %903
      %905 = vrot.lane.b32.xlu0 %v778, 16
      %v906 = vpop.permute.xlu0 %905
      %907 = vrot.lane.b32.xlu0 %v780, 16
      %v908 = vpop.permute.xlu0 %907
      %909 = vrot.lane.b32.xlu0 %v782, 16
      %v910 = vpop.permute.xlu0 %909
      %911 = vrot.lane.b32.xlu0 %v784, 16
      %v912 = vpop.permute.xlu0 %911
      %913 = vrot.lane.b32.xlu0 %v786, 16
      %v914 = vpop.permute.xlu0 %913
      %915 = vrot.lane.b32.xlu0 %v788, 16
      %v916 = vpop.permute.xlu0 %915
      %917 = vrot.lane.b32.xlu0 %v790, 16
      %v918 = vpop.permute.xlu0 %917
      %919 = vrot.lane.b32.xlu0 %v792, 16
      %v920 = vpop.permute.xlu0 %919
      %921 = vrot.lane.b32.xlu0 %v794, 16
      %v922 = vpop.permute.xlu0 %921
      %923 = vrot.lane.b32.xlu0 %v796, 16
      %v924 = vpop.permute.xlu0 %923
      %925 = vrot.lane.b32.xlu0 %v798, 16
      %v926 = vpop.permute.xlu0 %925
      %927 = vrot.lane.b32.xlu0 %v800, 16
      %v928 = vpop.permute.xlu0 %927
      %929 = vrot.lane.b32.xlu0 %v802, 16
      %v930 = vpop.permute.xlu0 %929
      %931 = vrot.lane.b32.xlu0 %v804, 16
      %v932 = vpop.permute.xlu0 %931
      %933 = vrot.lane.b32.xlu0 %v806, 16
      %v934 = vpop.permute.xlu0 %933
      %935 = vrot.lane.b32.xlu0 %v808, 16
      %v936 = vpop.permute.xlu0 %935
      %937 = vrot.lane.b32.xlu0 %v810, 16
      %v938 = vpop.permute.xlu0 %937
      %939 = vrot.lane.b32.xlu0 %v812, 16
      %v940 = vpop.permute.xlu0 %939
      %941 = vrot.lane.b32.xlu0 %v814, 16
      %v942 = vpop.permute.xlu0 %941
      %943 = vrot.lane.b32.xlu0 %v816, 16
      %v944 = vpop.permute.xlu0 %943
      %945 = vrot.lane.b32.xlu0 %v818, 16
      %v946 = vpop.permute.xlu0 %945
      %947 = vrot.lane.b32.xlu0 %v820, 16
      %v948 = vpop.permute.xlu0 %947
      %949 = vrot.lane.b32.xlu0 %v822, 16
      %v950 = vpop.permute.xlu0 %949
      %951 = vrot.lane.b32.xlu0 %v824, 16
      %v952 = vpop.permute.xlu0 %951
      %953 = vrot.lane.b32.xlu0 %v826, 16
      %v954 = vpop.permute.xlu0 %953
      %955 = vrot.lane.b32.xlu0 %v828, 16
      %v956 = vpop.permute.xlu0 %955
      %957 = vrot.lane.b32.xlu0 %v830, 16
      %v958 = vpop.permute.xlu0 %957
      %959 = vrot.lane.b32.xlu0 %v832, 16
      %v960 = vpop.permute.xlu0 %959
      %961 = vrot.lane.b32.xlu0 %v834, 16
      %v962 = vpop.permute.xlu0 %961
      %963 = vrot.lane.b32.xlu0 %v836, 16
      %v964 = vpop.permute.xlu0 %963
      %965 = vrot.lane.b32.xlu0 %v838, 16
      %v966 = vpop.permute.xlu0 %965
      %967 = vrot.lane.b32.xlu0 %v840, 16
      %v968 = vpop.permute.xlu0 %967
      %969 = vrot.lane.b32.xlu0 %v842, 16
      %v970 = vpop.permute.xlu0 %969
      %971 = vrot.lane.b32.xlu0 %v844, 16
      %v972 = vpop.permute.xlu0 %971
      %973 = vrot.lane.b32.xlu0 %v846, 16
      %v974 = vpop.permute.xlu0 %973
      %975 = vrot.lane.b32.xlu0 %v848, 16
      %v976 = vpop.permute.xlu0 %975
      %977 = vrot.lane.b32.xlu0 %v850, 16
      %v978 = vpop.permute.xlu0 %977
      %vm1043 = vcmask 1045504
      %v1044 = vrot.slane %v717, 2
      %v1045 = vrot.slane %v524, 2
      %v1046 = vsel %vm1043, %v1044, %v1045
      %v1047 = vrot.slane %v526, 2
      %v1048 = vsel %vm1043, %v1045, %v1047
      %v1049 = vrot.slane %v528, 2
      %v1050 = vsel %vm1043, %v1047, %v1049
      %v1051 = vrot.slane %v530, 2
      %v1052 = vsel %vm1043, %v1049, %v1051
      %v1053 = vrot.slane %v532, 2
      %v1054 = vsel %vm1043, %v1051, %v1053
      %v1055 = vrot.slane %v534, 2
      %v1056 = vsel %vm1043, %v1053, %v1055
      %v1057 = vrot.slane %v536, 2
      %v1058 = vsel %vm1043, %v1055, %v1057
      %v1059 = vrot.slane %v538, 2
      %v1060 = vsel %vm1043, %v1057, %v1059
      %v1061 = vrot.slane %v540, 2
      %v1062 = vsel %vm1043, %v1059, %v1061
      %v1063 = vrot.slane %v542, 2
      %v1064 = vsel %vm1043, %v1061, %v1063
      %v1065 = vrot.slane %v544, 2
      %v1066 = vsel %vm1043, %v1063, %v1065
      %v1067 = vrot.slane %v546, 2
      %v1068 = vsel %vm1043, %v1065, %v1067
      %v1069 = vrot.slane %v548, 2
      %v1070 = vsel %vm1043, %v1067, %v1069
      %v1071 = vrot.slane %v550, 2
      %v1072 = vsel %vm1043, %v1069, %v1071
      %v1073 = vrot.slane %v552, 2
      %v1074 = vsel %vm1043, %v1071, %v1073
      %v1075 = vrot.slane %v554, 2
      %v1076 = vsel %vm1043, %v1073, %v1075
      %v1077 = vrot.slane %v556, 2
      %v1078 = vsel %vm1043, %v1075, %v1077
      %v1079 = vrot.slane %v558, 2
      %v1080 = vsel %vm1043, %v1077, %v1079
      %v1081 = vrot.slane %v560, 2
      %v1082 = vsel %vm1043, %v1079, %v1081
      %v1083 = vrot.slane %v562, 2
      %v1084 = vsel %vm1043, %v1081, %v1083
      %v1085 = vrot.slane %v564, 2
      %v1086 = vsel %vm1043, %v1083, %v1085
      %v1087 = vrot.slane %v566, 2
      %v1088 = vsel %vm1043, %v1085, %v1087
      %v1089 = vrot.slane %v568, 2
      %v1090 = vsel %vm1043, %v1087, %v1089
      %v1091 = vrot.slane %v570, 2
      %v1092 = vsel %vm1043, %v1089, %v1091
      %v1093 = vrot.slane %v572, 2
      %v1094 = vsel %vm1043, %v1091, %v1093
      %v1095 = vrot.slane %v574, 2
      %v1096 = vsel %vm1043, %v1093, %v1095
      %v1097 = vrot.slane %v576, 2
      %v1098 = vsel %vm1043, %v1095, %v1097
      %v1099 = vrot.slane %v578, 2
      %v1100 = vsel %vm1043, %v1097, %v1099
      %v1101 = vrot.slane %v580, 2
      %v1102 = vsel %vm1043, %v1099, %v1101
      %v1103 = vrot.slane %v582, 2
      %v1104 = vsel %vm1043, %v1101, %v1103
      %v1105 = vrot.slane %v584, 2
      %v1106 = vsel %vm1043, %v1103, %v1105
      %v1107 = vrot.slane %v586, 2
      %v1108 = vsel %vm1043, %v1105, %v1107
      %v1109 = vrot.slane %v588, 2
      %v1110 = vsel %vm1043, %v1107, %v1109
      %v1111 = vrot.slane %v590, 2
      %v1112 = vsel %vm1043, %v1109, %v1111
      %v1113 = vrot.slane %v592, 2
      %v1114 = vsel %vm1043, %v1111, %v1113
      %v1115 = vrot.slane %v594, 2
      %v1116 = vsel %vm1043, %v1113, %v1115
      %v1117 = vrot.slane %v596, 2
      %v1118 = vsel %vm1043, %v1115, %v1117
      %v1119 = vrot.slane %v598, 2
      %v1120 = vsel %vm1043, %v1117, %v1119
      %v1121 = vrot.slane %v600, 2
      %v1122 = vsel %vm1043, %v1119, %v1121
      %v1123 = vrot.slane %v602, 2
      %v1124 = vsel %vm1043, %v1121, %v1123
      %v1125 = vrot.slane %v604, 2
      %v1126 = vsel %vm1043, %v1123, %v1125
      %v1127 = vrot.slane %v606, 2
      %v1128 = vsel %vm1043, %v1125, %v1127
      %v1129 = vrot.slane %v608, 2
      %v1130 = vsel %vm1043, %v1127, %v1129
      %v1131 = vrot.slane %v610, 2
      %v1132 = vsel %vm1043, %v1129, %v1131
      %v1133 = vrot.slane %v612, 2
      %v1134 = vsel %vm1043, %v1131, %v1133
      %v1135 = vrot.slane %v614, 2
      %v1136 = vsel %vm1043, %v1133, %v1135
      %v1137 = vrot.slane %v616, 2
      %v1138 = vsel %vm1043, %v1135, %v1137
      %v1139 = vrot.slane %v618, 2
      %v1140 = vsel %vm1043, %v1137, %v1139
      %v1141 = vrot.slane %v620, 2
      %v1142 = vsel %vm1043, %v1139, %v1141
      %v1143 = vrot.slane %v622, 2
      %v1144 = vsel %vm1043, %v1141, %v1143
      %v1145 = vrot.slane %v624, 2
      %v1146 = vsel %vm1043, %v1143, %v1145
      %v1147 = vrot.slane %v626, 2
      %v1148 = vsel %vm1043, %v1145, %v1147
      %v1149 = vrot.slane %v628, 2
      %v1150 = vsel %vm1043, %v1147, %v1149
      %v1151 = vrot.slane %v630, 2
      %v1152 = vsel %vm1043, %v1149, %v1151
      %v1153 = vrot.slane %v632, 2
      %v1154 = vsel %vm1043, %v1151, %v1153
      %v1155 = vrot.slane %v634, 2
      %v1156 = vsel %vm1043, %v1153, %v1155
      %v1157 = vrot.slane %v636, 2
      %v1158 = vsel %vm1043, %v1155, %v1157
      %v1159 = vrot.slane %v638, 2
      %v1160 = vsel %vm1043, %v1157, %v1159
      %v1161 = vrot.slane %v640, 2
      %v1162 = vsel %vm1043, %v1159, %v1161
      %v1163 = vrot.slane %v642, 2
      %v1164 = vsel %vm1043, %v1161, %v1163
      %v1165 = vrot.slane %v644, 2
      %v1166 = vsel %vm1043, %v1163, %v1165
      %v1167 = vrot.slane %v646, 2
      %v1168 = vsel %vm1043, %v1165, %v1167
      %v1169 = vrot.slane %v648, 2
      %v1170 = vsel %vm1043, %v1167, %v1169
      %v1171 = vrot.slane %v718, 2
      %v1172 = vsel %vm1043, %v1169, %v1171
      %1173 = vrot.lane.b32.xlu0 %v1046, 32
      %v1174 = vpop.permute.xlu0 %1173
      %1175 = vrot.lane.b32.xlu0 %v1048, 32
      %v1176 = vpop.permute.xlu0 %1175
      %1177 = vrot.lane.b32.xlu0 %v1050, 32
      %v1178 = vpop.permute.xlu0 %1177
      %1179 = vrot.lane.b32.xlu0 %v1052, 32
      %v1180 = vpop.permute.xlu0 %1179
      %1181 = vrot.lane.b32.xlu0 %v1054, 32
      %v1182 = vpop.permute.xlu0 %1181
      %1183 = vrot.lane.b32.xlu0 %v1056, 32
      %v1184 = vpop.permute.xlu0 %1183
      %1185 = vrot.lane.b32.xlu0 %v1058, 32
      %v1186 = vpop.permute.xlu0 %1185
      %1187 = vrot.lane.b32.xlu0 %v1060, 32
      %v1188 = vpop.permute.xlu0 %1187
      %1189 = vrot.lane.b32.xlu0 %v1062, 32
      %v1190 = vpop.permute.xlu0 %1189
      %1191 = vrot.lane.b32.xlu0 %v1064, 32
      %v1192 = vpop.permute.xlu0 %1191
      %1193 = vrot.lane.b32.xlu0 %v1066, 32
      %v1194 = vpop.permute.xlu0 %1193
      %1195 = vrot.lane.b32.xlu0 %v1068, 32
      %v1196 = vpop.permute.xlu0 %1195
      %1197 = vrot.lane.b32.xlu0 %v1070, 32
      %v1198 = vpop.permute.xlu0 %1197
      %1199 = vrot.lane.b32.xlu0 %v1072, 32
      %v1200 = vpop.permute.xlu0 %1199
      %1201 = vrot.lane.b32.xlu0 %v1074, 32
      %v1202 = vpop.permute.xlu0 %1201
      %1203 = vrot.lane.b32.xlu0 %v1076, 32
      %v1204 = vpop.permute.xlu0 %1203
      %1205 = vrot.lane.b32.xlu0 %v1078, 32
      %v1206 = vpop.permute.xlu0 %1205
      %1207 = vrot.lane.b32.xlu0 %v1080, 32
      %v1208 = vpop.permute.xlu0 %1207
      %1209 = vrot.lane.b32.xlu0 %v1082, 32
      %v1210 = vpop.permute.xlu0 %1209
      %1211 = vrot.lane.b32.xlu0 %v1084, 32
      %v1212 = vpop.permute.xlu0 %1211
      %1213 = vrot.lane.b32.xlu0 %v1086, 32
      %v1214 = vpop.permute.xlu0 %1213
      %1215 = vrot.lane.b32.xlu0 %v1088, 32
      %v1216 = vpop.permute.xlu0 %1215
      %1217 = vrot.lane.b32.xlu0 %v1090, 32
      %v1218 = vpop.permute.xlu0 %1217
      %1219 = vrot.lane.b32.xlu0 %v1092, 32
      %v1220 = vpop.permute.xlu0 %1219
      %1221 = vrot.lane.b32.xlu0 %v1094, 32
      %v1222 = vpop.permute.xlu0 %1221
      %1223 = vrot.lane.b32.xlu0 %v1096, 32
      %v1224 = vpop.permute.xlu0 %1223
      %1225 = vrot.lane.b32.xlu0 %v1098, 32
      %v1226 = vpop.permute.xlu0 %1225
      %1227 = vrot.lane.b32.xlu0 %v1100, 32
      %v1228 = vpop.permute.xlu0 %1227
      %1229 = vrot.lane.b32.xlu0 %v1102, 32
      %v1230 = vpop.permute.xlu0 %1229
      %1231 = vrot.lane.b32.xlu0 %v1104, 32
      %v1232 = vpop.permute.xlu0 %1231
      %1233 = vrot.lane.b32.xlu0 %v1106, 32
      %v1234 = vpop.permute.xlu0 %1233
      %1235 = vrot.lane.b32.xlu0 %v1108, 32
      %v1236 = vpop.permute.xlu0 %1235
      %1237 = vrot.lane.b32.xlu0 %v1110, 32
      %v1238 = vpop.permute.xlu0 %1237
      %1239 = vrot.lane.b32.xlu0 %v1112, 32
      %v1240 = vpop.permute.xlu0 %1239
      %1241 = vrot.lane.b32.xlu0 %v1114, 32
      %v1242 = vpop.permute.xlu0 %1241
      %1243 = vrot.lane.b32.xlu0 %v1116, 32
      %v1244 = vpop.permute.xlu0 %1243
      %1245 = vrot.lane.b32.xlu0 %v1118, 32
      %v1246 = vpop.permute.xlu0 %1245
      %1247 = vrot.lane.b32.xlu0 %v1120, 32
      %v1248 = vpop.permute.xlu0 %1247
      %1249 = vrot.lane.b32.xlu0 %v1122, 32
      %v1250 = vpop.permute.xlu0 %1249
      %1251 = vrot.lane.b32.xlu0 %v1124, 32
      %v1252 = vpop.permute.xlu0 %1251
      %1253 = vrot.lane.b32.xlu0 %v1126, 32
      %v1254 = vpop.permute.xlu0 %1253
      %1255 = vrot.lane.b32.xlu0 %v1128, 32
      %v1256 = vpop.permute.xlu0 %1255
      %1257 = vrot.lane.b32.xlu0 %v1130, 32
      %v1258 = vpop.permute.xlu0 %1257
      %1259 = vrot.lane.b32.xlu0 %v1132, 32
      %v1260 = vpop.permute.xlu0 %1259
      %1261 = vrot.lane.b32.xlu0 %v1134, 32
      %v1262 = vpop.permute.xlu0 %1261
      %1263 = vrot.lane.b32.xlu0 %v1136, 32
      %v1264 = vpop.permute.xlu0 %1263
      %1265 = vrot.lane.b32.xlu0 %v1138, 32
      %v1266 = vpop.permute.xlu0 %1265
      %1267 = vrot.lane.b32.xlu0 %v1140, 32
      %v1268 = vpop.permute.xlu0 %1267
      %1269 = vrot.lane.b32.xlu0 %v1142, 32
      %v1270 = vpop.permute.xlu0 %1269
      %1271 = vrot.lane.b32.xlu0 %v1144, 32
      %v1272 = vpop.permute.xlu0 %1271
      %1273 = vrot.lane.b32.xlu0 %v1146, 32
      %v1274 = vpop.permute.xlu0 %1273
      %1275 = vrot.lane.b32.xlu0 %v1148, 32
      %v1276 = vpop.permute.xlu0 %1275
      %1277 = vrot.lane.b32.xlu0 %v1150, 32
      %v1278 = vpop.permute.xlu0 %1277
      %1279 = vrot.lane.b32.xlu0 %v1152, 32
      %v1280 = vpop.permute.xlu0 %1279
      %1281 = vrot.lane.b32.xlu0 %v1154, 32
      %v1282 = vpop.permute.xlu0 %1281
      %1283 = vrot.lane.b32.xlu0 %v1156, 32
      %v1284 = vpop.permute.xlu0 %1283
      %1285 = vrot.lane.b32.xlu0 %v1158, 32
      %v1286 = vpop.permute.xlu0 %1285
      %1287 = vrot.lane.b32.xlu0 %v1160, 32
      %v1288 = vpop.permute.xlu0 %1287
      %1289 = vrot.lane.b32.xlu0 %v1162, 32
      %v1290 = vpop.permute.xlu0 %1289
      %1291 = vrot.lane.b32.xlu0 %v1164, 32
      %v1292 = vpop.permute.xlu0 %1291
      %1293 = vrot.lane.b32.xlu0 %v1166, 32
      %v1294 = vpop.permute.xlu0 %1293
      %1295 = vrot.lane.b32.xlu0 %v1168, 32
      %v1296 = vpop.permute.xlu0 %1295
      %1297 = vrot.lane.b32.xlu0 %v1170, 32
      %v1298 = vpop.permute.xlu0 %1297
      %1299 = vrot.lane.b32.xlu0 %v1172, 32
      %v1300 = vpop.permute.xlu0 %1299
      %vm1365 = vcmask 130048
      %v1366 = vsel %vm1365, %v717, %v852
      %v1367 = vsel %vm1365, %v524, %v854
      %v1368 = vsel %vm1365, %v526, %v856
      %v1369 = vsel %vm1365, %v528, %v858
      %v1370 = vsel %vm1365, %v530, %v860
      %v1371 = vsel %vm1365, %v532, %v862
      %v1372 = vsel %vm1365, %v534, %v864
      %v1373 = vsel %vm1365, %v536, %v866
      %v1374 = vsel %vm1365, %v538, %v868
      %v1375 = vsel %vm1365, %v540, %v870
      %v1376 = vsel %vm1365, %v542, %v872
      %v1377 = vsel %vm1365, %v544, %v874
      %v1378 = vsel %vm1365, %v546, %v876
      %v1379 = vsel %vm1365, %v548, %v878
      %v1380 = vsel %vm1365, %v550, %v880
      %v1381 = vsel %vm1365, %v552, %v882
      %v1382 = vsel %vm1365, %v554, %v884
      %v1383 = vsel %vm1365, %v556, %v886
      %v1384 = vsel %vm1365, %v558, %v888
      %v1385 = vsel %vm1365, %v560, %v890
      %v1386 = vsel %vm1365, %v562, %v892
      %v1387 = vsel %vm1365, %v564, %v894
      %v1388 = vsel %vm1365, %v566, %v896
      %v1389 = vsel %vm1365, %v568, %v898
      %v1390 = vsel %vm1365, %v570, %v900
      %v1391 = vsel %vm1365, %v572, %v902
      %v1392 = vsel %vm1365, %v574, %v904
      %v1393 = vsel %vm1365, %v576, %v906
      %v1394 = vsel %vm1365, %v578, %v908
      %v1395 = vsel %vm1365, %v580, %v910
      %v1396 = vsel %vm1365, %v582, %v912
      %v1397 = vsel %vm1365, %v584, %v914
      %v1398 = vsel %vm1365, %v586, %v916
      %v1399 = vsel %vm1365, %v588, %v918
      %v1400 = vsel %vm1365, %v590, %v920
      %v1401 = vsel %vm1365, %v592, %v922
      %v1402 = vsel %vm1365, %v594, %v924
      %v1403 = vsel %vm1365, %v596, %v926
      %v1404 = vsel %vm1365, %v598, %v928
      %v1405 = vsel %vm1365, %v600, %v930
      %v1406 = vsel %vm1365, %v602, %v932
      %v1407 = vsel %vm1365, %v604, %v934
      %v1408 = vsel %vm1365, %v606, %v936
      %v1409 = vsel %vm1365, %v608, %v938
      %v1410 = vsel %vm1365, %v610, %v940
      %v1411 = vsel %vm1365, %v612, %v942
      %v1412 = vsel %vm1365, %v614, %v944
      %v1413 = vsel %vm1365, %v616, %v946
      %v1414 = vsel %vm1365, %v618, %v948
      %v1415 = vsel %vm1365, %v620, %v950
      %v1416 = vsel %vm1365, %v622, %v952
      %v1417 = vsel %vm1365, %v624, %v954
      %v1418 = vsel %vm1365, %v626, %v956
      %v1419 = vsel %vm1365, %v628, %v958
      %v1420 = vsel %vm1365, %v630, %v960
      %v1421 = vsel %vm1365, %v632, %v962
      %v1422 = vsel %vm1365, %v634, %v964
      %v1423 = vsel %vm1365, %v636, %v966
      %v1424 = vsel %vm1365, %v638, %v968
      %v1425 = vsel %vm1365, %v640, %v970
      %v1426 = vsel %vm1365, %v642, %v972
      %v1427 = vsel %vm1365, %v644, %v974
      %v1428 = vsel %vm1365, %v646, %v976
      %v1429 = vsel %vm1365, %v648, %v978
      %vm1430 = vcmask 261120
      %v1431 = vsel %vm1430, %v1366, %v1174
      %v1432 = vsel %vm1430, %v1367, %v1176
      %v1433 = vsel %vm1430, %v1368, %v1178
      %v1434 = vsel %vm1430, %v1369, %v1180
      %v1435 = vsel %vm1430, %v1370, %v1182
      %v1436 = vsel %vm1430, %v1371, %v1184
      %v1437 = vsel %vm1430, %v1372, %v1186
      %v1438 = vsel %vm1430, %v1373, %v1188
      %v1439 = vsel %vm1430, %v1374, %v1190
      %v1440 = vsel %vm1430, %v1375, %v1192
      %v1441 = vsel %vm1430, %v1376, %v1194
      %v1442 = vsel %vm1430, %v1377, %v1196
      %v1443 = vsel %vm1430, %v1378, %v1198
      %v1444 = vsel %vm1430, %v1379, %v1200
      %v1445 = vsel %vm1430, %v1380, %v1202
      %v1446 = vsel %vm1430, %v1381, %v1204
      %v1447 = vsel %vm1430, %v1382, %v1206
      %v1448 = vsel %vm1430, %v1383, %v1208
      %v1449 = vsel %vm1430, %v1384, %v1210
      %v1450 = vsel %vm1430, %v1385, %v1212
      %v1451 = vsel %vm1430, %v1386, %v1214
      %v1452 = vsel %vm1430, %v1387, %v1216
      %v1453 = vsel %vm1430, %v1388, %v1218
      %v1454 = vsel %vm1430, %v1389, %v1220
      %v1455 = vsel %vm1430, %v1390, %v1222
      %v1456 = vsel %vm1430, %v1391, %v1224
      %v1457 = vsel %vm1430, %v1392, %v1226
      %v1458 = vsel %vm1430, %v1393, %v1228
      %v1459 = vsel %vm1430, %v1394, %v1230
      %v1460 = vsel %vm1430, %v1395, %v1232
      %v1461 = vsel %vm1430, %v1396, %v1234
      %v1462 = vsel %vm1430, %v1397, %v1236
      %v1463 = vsel %vm1430, %v1398, %v1238
      %v1464 = vsel %vm1430, %v1399, %v1240
      %v1465 = vsel %vm1430, %v1400, %v1242
      %v1466 = vsel %vm1430, %v1401, %v1244
      %v1467 = vsel %vm1430, %v1402, %v1246
      %v1468 = vsel %vm1430, %v1403, %v1248
      %v1469 = vsel %vm1430, %v1404, %v1250
      %v1470 = vsel %vm1430, %v1405, %v1252
      %v1471 = vsel %vm1430, %v1406, %v1254
      %v1472 = vsel %vm1430, %v1407, %v1256
      %v1473 = vsel %vm1430, %v1408, %v1258
      %v1474 = vsel %vm1430, %v1409, %v1260
      %v1475 = vsel %vm1430, %v1410, %v1262
      %v1476 = vsel %vm1430, %v1411, %v1264
      %v1477 = vsel %vm1430, %v1412, %v1266
      %v1478 = vsel %vm1430, %v1413, %v1268
      %v1479 = vsel %vm1430, %v1414, %v1270
      %v1480 = vsel %vm1430, %v1415, %v1272
      %v1481 = vsel %vm1430, %v1416, %v1274
      %v1482 = vsel %vm1430, %v1417, %v1276
      %v1483 = vsel %vm1430, %v1418, %v1278
      %v1484 = vsel %vm1430, %v1419, %v1280
      %v1485 = vsel %vm1430, %v1420, %v1282
      %v1486 = vsel %vm1430, %v1421, %v1284
      %v1487 = vsel %vm1430, %v1422, %v1286
      %v1488 = vsel %vm1430, %v1423, %v1288
      %v1489 = vsel %vm1430, %v1424, %v1290
      %v1490 = vsel %vm1430, %v1425, %v1292
      %v1491 = vsel %vm1430, %v1426, %v1294
      %v1492 = vsel %vm1430, %v1427, %v1296
      %v1493 = vsel %vm1430, %v1428, %v1298
      %v1494 = vsel %vm1430, %v1429, %v1300
      %v1495 = vld [vmem:[%s3] sm:$0xff]
      %v1496 = vld [vmem:[%s3 + $0x8] sm:$0xff]
      %v1497 = vld [vmem:[%s3 + $0x10] sm:$0xff]
      %v1498 = vld [vmem:[%s3 + $0x18] sm:$0xff]
      %v1499 = vld [vmem:[%s3 + $0x20] sm:$0xff]
      %v1500 = vld [vmem:[%s3 + $0x28] sm:$0xff]
      %v1501 = vld [vmem:[%s4] sm:$0x1]
      %v1503 = vlaneseq
      %v1504 = vshrl.u32 %v1503, 7
      %v1505 = vsub.s32 0, %v1504
      %v1506 = vrot.slane %v1501, %v1505
      %vm1508 = vcmask 392192
      %v1510 = vsel %vm1508, %v1431, 0
      %v1513 = vsel %vm1508, %v1432, 0
      %v1516 = vsel %vm1508, %v1433, 0
      %v1519 = vsel %vm1508, %v1434, 0
      %v1522 = vsel %vm1508, %v1435, 0
      %v1525 = vsel %vm1508, %v1436, 0
      %v1528 = vsel %vm1508, %v1437, 0
      %v1531 = vsel %vm1508, %v1438, 0
      %v1534 = vsel %vm1508, %v1439, 0
      %v1537 = vsel %vm1508, %v1440, 0
      %v1540 = vsel %vm1508, %v1441, 0
      %v1543 = vsel %vm1508, %v1442, 0
      %v1546 = vsel %vm1508, %v1443, 0
      %v1549 = vsel %vm1508, %v1444, 0
      %v1552 = vsel %vm1508, %v1445, 0
      %v1555 = vsel %vm1508, %v1446, 0
      %v1558 = vsel %vm1508, %v1447, 0
      %v1561 = vsel %vm1508, %v1448, 0
      %v1564 = vsel %vm1508, %v1449, 0
      %v1567 = vsel %vm1508, %v1450, 0
      %v1570 = vsel %vm1508, %v1451, 0
      %v1573 = vsel %vm1508, %v1452, 0
      %v1576 = vsel %vm1508, %v1453, 0
      %v1579 = vsel %vm1508, %v1454, 0
      %v1582 = vsel %vm1508, %v1455, 0
      %v1585 = vsel %vm1508, %v1456, 0
      %v1588 = vsel %vm1508, %v1457, 0
      %v1591 = vsel %vm1508, %v1458, 0
      %v1594 = vsel %vm1508, %v1459, 0
      %v1597 = vsel %vm1508, %v1460, 0
      %v1600 = vsel %vm1508, %v1461, 0
      %v1603 = vsel %vm1508, %v1462, 0
      %v1606 = vsel %vm1508, %v1463, 0
      %v1609 = vsel %vm1508, %v1464, 0
      %v1612 = vsel %vm1508, %v1465, 0
      %v1615 = vsel %vm1508, %v1466, 0
      %v1618 = vsel %vm1508, %v1467, 0
      %v1621 = vsel %vm1508, %v1468, 0
      %v1624 = vsel %vm1508, %v1469, 0
      %v1627 = vsel %vm1508, %v1470, 0
      %v1630 = vsel %vm1508, %v1471, 0
      %v1633 = vsel %vm1508, %v1472, 0
      %v1636 = vsel %vm1508, %v1473, 0
      %v1639 = vsel %vm1508, %v1474, 0
      %v1642 = vsel %vm1508, %v1475, 0
      %v1645 = vsel %vm1508, %v1476, 0
      %v1648 = vsel %vm1508, %v1477, 0
      %v1651 = vsel %vm1508, %v1478, 0
      %v1654 = vsel %vm1508, %v1479, 0
      %v1657 = vsel %vm1508, %v1480, 0
      %v1660 = vsel %vm1508, %v1481, 0
      %v1663 = vsel %vm1508, %v1482, 0
      %v1666 = vsel %vm1508, %v1483, 0
      %v1669 = vsel %vm1508, %v1484, 0
      %v1672 = vsel %vm1508, %v1485, 0
      %v1675 = vsel %vm1508, %v1486, 0
      %v1678 = vsel %vm1508, %v1487, 0
      %v1681 = vsel %vm1508, %v1488, 0
      %v1684 = vsel %vm1508, %v1489, 0
      %v1687 = vsel %vm1508, %v1490, 0
      %v1690 = vsel %vm1508, %v1491, 0
      %v1693 = vsel %vm1508, %v1492, 0
      %v1696 = vsel %vm1508, %v1493, 0
      %v1699 = vsel %vm1508, %v1494, 0
      %1701 = vmatprep.subr.mxu0 0.0
      %1702 = vmatpush1.msra.mxu0 %v1495
      %1703 = vmatprep.subr.mxu0 0.0
      %1704 = vmatpush1.msra.mxu0 %v1496
      %1705 = vmatprep.subr.mxu0 0.0
      %1706 = vmatpush1.msra.mxu0 %v1497
      %1707 = vmatprep.subr.mxu0 0.0
      %1708 = vmatpush1.msra.mxu0 %v1498
      %1709 = vmatprep.subr.mxu0 0.0
      %1710 = vmatpush1.msra.mxu0 %v1499
      %1711 = vmatprep.subr.mxu0 0.0
      %1712 = vmatpush1.msra.mxu0 %v1500
      %1713 = vmatprep.subr.mxu0 0.0
      %1714 = vmatpush1.msra.mxu0 0.0
      %1715 = vmatprep.subr.mxu0 0.0
      %1716 = vmatpush1.msra.mxu0 0.0
      %1717 = vmatprep.subr.mxu0 0.0
      %1718 = vmatpush1.msra.mxu0 0.0
      %1719 = vmatprep.subr.mxu0 0.0
      %1720 = vmatpush1.msra.mxu0 0.0
      %1721 = vmatprep.subr.mxu0 0.0
      %1722 = vmatpush1.msra.mxu0 0.0
      %1723 = vmatprep.subr.mxu0 0.0
      %1724 = vmatpush1.msra.mxu0 0.0
      %1725 = vmatprep.subr.mxu0 0.0
      %1726 = vmatpush1.msra.mxu0 0.0
      %1727 = vmatprep.subr.mxu0 0.0
      %1728 = vmatpush1.msra.mxu0 0.0
      %1729 = vmatprep.subr.mxu0 0.0
      %1730 = vmatpush1.msra.mxu0 0.0
      %1731 = vmatprep.subr.mxu0 0.0
      %1732 = vmatpush1.msra.mxu0 0.0
      %1733 = vmatprep.subr.mxu0 0.0
      %1734 = vmatpush1.msra.mxu0 0.0
      %1735 = vmatprep.subr.mxu0 0.0
      %1736 = vmatpush1.msra.mxu0 0.0
      %1737 = vmatprep.subr.mxu0 0.0
      %1738 = vmatpush1.msra.mxu0 0.0
      %1739 = vmatprep.subr.mxu0 0.0
      %1740 = vmatpush1.msra.mxu0 0.0
      %1741 = vmatprep.subr.mxu0 0.0
      %1742 = vmatpush1.msra.mxu0 0.0
      %1743 = vmatprep.subr.mxu0 0.0
      %1744 = vmatpush1.msra.mxu0 0.0
      %1745 = vmatprep.subr.mxu0 0.0
      %1746 = vmatpush1.msra.mxu0 0.0
      %1747 = vmatprep.subr.mxu0 0.0
      %1748 = vmatpush1.msra.mxu0 0.0
      %1749 = vmatprep.subr.mxu0 0.0
      %1750 = vmatpush1.msra.mxu0 0.0
      %1751 = vmatprep.subr.mxu0 0.0
      %1752 = vmatpush1.msra.mxu0 0.0
      %1753 = vmatprep.subr.mxu0 0.0
      %1754 = vmatpush1.msra.mxu0 0.0
      %1755 = vmatprep.subr.mxu0 0.0
      %1756 = vmatpush1.msra.mxu0 0.0
      %1757 = vmatprep.subr.mxu0 0.0
      %1758 = vmatpush1.msra.mxu0 0.0
      %1759 = vmatprep.subr.mxu0 0.0
      %1760 = vmatpush1.msra.mxu0 0.0
      %1761 = vmatprep.subr.mxu0 0.0
      %1762 = vmatpush1.msra.mxu0 0.0
      %1763 = vmatprep.subr.mxu0 0.0
      %1764 = vmatpush1.msra.mxu0 0.0
      %1765 = vmatprep.mubr.f32.mxu0 0.0
      %1766 = vmatmul.mubr.f32.gmra.mrb[0].mxu0 %v1510
      %v1767 = vpop.f32.mrb[0].mxu0
      %v1768 = vadd.f32 %v1506, %v1767
      %v1769 = vpop.f32.mrb[0].mxu0
      %1770 = vmatprep.mubr.f32.mxu0 0.0
      %1771 = vmatmul.mubr.f32.gmra.mrb[0].mxu0 %v1513
      %v1772 = vpop.f32.mrb[0].mxu0
      %v1773 = vadd.f32 %v1506, %v1772
      %v1774 = vpop.f32.mrb[0].mxu0
      %1775 = vmatprep.mubr.f32.mxu0 0.0
      %1776 = vmatmul.mubr.f32.gmra.mrb[0].mxu0 %v1516
      %v1777 = vpop.f32.mrb[0].mxu0
      %v1778 = vadd.f32 %v1506, %v1777
      %v1779 = vpop.f32.mrb[0].mxu0
      %1780 = vmatprep.mubr.f32.mxu0 0.0
      %1781 = vmatmul.mubr.f32.gmra.mrb[0].mxu0 %v1519
      %v1782 = vpop.f32.mrb[0].mxu0
      %v1783 = vadd.f32 %v1506, %v1782
      %v1784 = vpop.f32.mrb[0].mxu0
      %1785 = vmatprep.mubr.f32.mxu0 0.0
      %1786 = vmatmul.mubr.f32.gmra.mrb[0].mxu0 %v1522
      %v1787 = vpop.f32.mrb[0].mxu0
      %v1788 = vadd.f32 %v1506, %v1787
      %v1789 = vpop.f32.mrb[0].mxu0
      %1790 = vmatprep.mubr.f32.mxu0 0.0
      %1791 = vmatmul.mubr.f32.gmra.mrb[0].mxu0 %v1525
      %v1792 = vpop.f32.mrb[0].mxu0
      %v1793 = vadd.f32 %v1506, %v1792
      %v1794 = vpop.f32.mrb[0].mxu0
      %1795 = vmatprep.mubr.f32.mxu0 0.0
      %1796 = vmatmul.mubr.f32.gmra.mrb[0].mxu0 %v1528
      %v1797 = vpop.f32.mrb[0].mxu0
      %v1798 = vadd.f32 %v1506, %v1797
      %v1799 = vpop.f32.mrb[0].mxu0
      %1800 = vmatprep.mubr.f32.mxu0 0.0
      %1801 = vmatmul.mubr.f32.gmra.mrb[0].mxu0 %v1531
      %v1802 = vpop.f32.mrb[0].mxu0
      %v1803 = vadd.f32 %v1506, %v1802
      %v1804 = vpop.f32.mrb[0].mxu0
      %1805 = vmatprep.mubr.f32.mxu0 0.0
      %1806 = vmatmul.mubr.f32.gmra.mrb[0].mxu0 %v1534
      %v1807 = vpop.f32.mrb[0].mxu0
      %v1808 = vadd.f32 %v1506, %v1807
      %v1809 = vpop.f32.mrb[0].mxu0
      %1810 = vmatprep.mubr.f32.mxu0 0.0
      %1811 = vmatmul.mubr.f32.gmra.mrb[0].mxu0 %v1537
      %v1812 = vpop.f32.mrb[0].mxu0
      %v1813 = vadd.f32 %v1506, %v1812
      %v1814 = vpop.f32.mrb[0].mxu0
      %1815 = vmatprep.mubr.f32.mxu0 0.0
      %1816 = vmatmul.mubr.f32.gmra.mrb[0].mxu0 %v1540
      %v1817 = vpop.f32.mrb[0].mxu0
      %v1818 = vadd.f32 %v1506, %v1817
      %v1819 = vpop.f32.mrb[0].mxu0
      %1820 = vmatprep.mubr.f32.mxu0 0.0
      %1821 = vmatmul.mubr.f32.gmra.mrb[0].mxu0 %v1543
      %v1822 = vpop.f32.mrb[0].mxu0
      %v1823 = vadd.f32 %v1506, %v1822
      %v1824 = vpop.f32.mrb[0].mxu0
      %1825 = vmatprep.mubr.f32.mxu0 0.0
      %1826 = vmatmul.mubr.f32.gmra.mrb[0].mxu0 %v1546
      %v1827 = vpop.f32.mrb[0].mxu0
      %v1828 = vadd.f32 %v1506, %v1827
      %v1829 = vpop.f32.mrb[0].mxu0
      %1830 = vmatprep.mubr.f32.mxu0 0.0
      %1831 = vmatmul.mubr.f32.gmra.mrb[0].mxu0 %v1549
      %v1832 = vpop.f32.mrb[0].mxu0
      %v1833 = vadd.f32 %v1506, %v1832
      %v1834 = vpop.f32.mrb[0].mxu0
      %1835 = vmatprep.mubr.f32.mxu0 0.0
      %1836 = vmatmul.mubr.f32.gmra.mrb[0].mxu0 %v1552
      %v1837 = vpop.f32.mrb[0].mxu0
      %v1838 = vadd.f32 %v1506, %v1837
      %v1839 = vpop.f32.mrb[0].mxu0
      %1840 = vmatprep.mubr.f32.mxu0 0.0
      %1841 = vmatmul.mubr.f32.gmra.mrb[0].mxu0 %v1555
      %v1842 = vpop.f32.mrb[0].mxu0
      %v1843 = vadd.f32 %v1506, %v1842
      %v1844 = vpop.f32.mrb[0].mxu0
      %1845 = vmatprep.mubr.f32.mxu0 0.0
      %1846 = vmatmul.mubr.f32.gmra.mrb[0].mxu0 %v1558
      %v1847 = vpop.f32.mrb[0].mxu0
      %v1848 = vadd.f32 %v1506, %v1847
      %v1849 = vpop.f32.mrb[0].mxu0
      %1850 = vmatprep.mubr.f32.mxu0 0.0
      %1851 = vmatmul.mubr.f32.gmra.mrb[0].mxu0 %v1561
      %v1852 = vpop.f32.mrb[0].mxu0
      %v1853 = vadd.f32 %v1506, %v1852
      %v1854 = vpop.f32.mrb[0].mxu0
      %1855 = vmatprep.mubr.f32.mxu0 0.0
      %1856 = vmatmul.mubr.f32.gmra.mrb[0].mxu0 %v1564
      %v1857 = vpop.f32.mrb[0].mxu0
      %v1858 = vadd.f32 %v1506, %v1857
      %v1859 = vpop.f32.mrb[0].mxu0
      %1860 = vmatprep.mubr.f32.mxu0 0.0
      %1861 = vmatmul.mubr.f32.gmra.mrb[0].mxu0 %v1567
      %v1862 = vpop.f32.mrb[0].mxu0
      %v1863 = vadd.f32 %v1506, %v1862
      %v1864 = vpop.f32.mrb[0].mxu0
      %1865 = vmatprep.mubr.f32.mxu0 0.0
      %1866 = vmatmul.mubr.f32.gmra.mrb[0].mxu0 %v1570
      %v1867 = vpop.f32.mrb[0].mxu0
      %v1868 = vadd.f32 %v1506, %v1867
      %v1869 = vpop.f32.mrb[0].mxu0
      %1870 = vmatprep.mubr.f32.mxu0 0.0
      %1871 = vmatmul.mubr.f32.gmra.mrb[0].mxu0 %v1573
      %v1872 = vpop.f32.mrb[0].mxu0
      %v1873 = vadd.f32 %v1506, %v1872
      %v1874 = vpop.f32.mrb[0].mxu0
      %1875 = vmatprep.mubr.f32.mxu0 0.0
      %1876 = vmatmul.mubr.f32.gmra.mrb[0].mxu0 %v1576
      %v1877 = vpop.f32.mrb[0].mxu0
      %v1878 = vadd.f32 %v1506, %v1877
      %v1879 = vpop.f32.mrb[0].mxu0
      %1880 = vmatprep.mubr.f32.mxu0 0.0
      %1881 = vmatmul.mubr.f32.gmra.mrb[0].mxu0 %v1579
      %v1882 = vpop.f32.mrb[0].mxu0
      %v1883 = vadd.f32 %v1506, %v1882
      %v1884 = vpop.f32.mrb[0].mxu0
      %1885 = vmatprep.mubr.f32.mxu0 0.0
      %1886 = vmatmul.mubr.f32.gmra.mrb[0].mxu0 %v1582
      %v1887 = vpop.f32.mrb[0].mxu0
      %v1888 = vadd.f32 %v1506, %v1887
      %v1889 = vpop.f32.mrb[0].mxu0
      %1890 = vmatprep.mubr.f32.mxu0 0.0
      %1891 = vmatmul.mubr.f32.gmra.mrb[0].mxu0 %v1585
      %v1892 = vpop.f32.mrb[0].mxu0
      %v1893 = vadd.f32 %v1506, %v1892
      %v1894 = vpop.f32.mrb[0].mxu0
      %1895 = vmatprep.mubr.f32.mxu0 0.0
      %1896 = vmatmul.mubr.f32.gmra.mrb[0].mxu0 %v1588
      %v1897 = vpop.f32.mrb[0].mxu0
      %v1898 = vadd.f32 %v1506, %v1897
      %v1899 = vpop.f32.mrb[0].mxu0
      %1900 = vmatprep.mubr.f32.mxu0 0.0
      %1901 = vmatmul.mubr.f32.gmra.mrb[0].mxu0 %v1591
      %v1902 = vpop.f32.mrb[0].mxu0
      %v1903 = vadd.f32 %v1506, %v1902
      %v1904 = vpop.f32.mrb[0].mxu0
      %1905 = vmatprep.mubr.f32.mxu0 0.0
      %1906 = vmatmul.mubr.f32.gmra.mrb[0].mxu0 %v1594
      %v1907 = vpop.f32.mrb[0].mxu0
      %v1908 = vadd.f32 %v1506, %v1907
      %v1909 = vpop.f32.mrb[0].mxu0
      %1910 = vmatprep.mubr.f32.mxu0 0.0
      %1911 = vmatmul.mubr.f32.gmra.mrb[0].mxu0 %v1597
      %v1912 = vpop.f32.mrb[0].mxu0
      %v1913 = vadd.f32 %v1506, %v1912
      %v1914 = vpop.f32.mrb[0].mxu0
      %1915 = vmatprep.mubr.f32.mxu0 0.0
      %1916 = vmatmul.mubr.f32.gmra.mrb[0].mxu0 %v1600
      %v1917 = vpop.f32.mrb[0].mxu0
      %v1918 = vadd.f32 %v1506, %v1917
      %v1919 = vpop.f32.mrb[0].mxu0
      %1920 = vmatprep.mubr.f32.mxu0 0.0
      %1921 = vmatmul.mubr.f32.gmra.mrb[0].mxu0 %v1603
      %v1922 = vpop.f32.mrb[0].mxu0
      %v1923 = vadd.f32 %v1506, %v1922
      %v1924 = vpop.f32.mrb[0].mxu0
      %1925 = vmatprep.mubr.f32.mxu0 0.0
      %1926 = vmatmul.mubr.f32.gmra.mrb[0].mxu0 %v1606
      %v1927 = vpop.f32.mrb[0].mxu0
      %v1928 = vadd.f32 %v1506, %v1927
      %v1929 = vpop.f32.mrb[0].mxu0
      %1930 = vmatprep.mubr.f32.mxu0 0.0
      %1931 = vmatmul.mubr.f32.gmra.mrb[0].mxu0 %v1609
      %v1932 = vpop.f32.mrb[0].mxu0
      %v1933 = vadd.f32 %v1506, %v1932
      %v1934 = vpop.f32.mrb[0].mxu0
      %1935 = vmatprep.mubr.f32.mxu0 0.0
      %1936 = vmatmul.mubr.f32.gmra.mrb[0].mxu0 %v1612
      %v1937 = vpop.f32.mrb[0].mxu0
      %v1938 = vadd.f32 %v1506, %v1937
      %v1939 = vpop.f32.mrb[0].mxu0
      %1940 = vmatprep.mubr.f32.mxu0 0.0
      %1941 = vmatmul.mubr.f32.gmra.mrb[0].mxu0 %v1615
      %v1942 = vpop.f32.mrb[0].mxu0
      %v1943 = vadd.f32 %v1506, %v1942
      %v1944 = vpop.f32.mrb[0].mxu0
      %1945 = vmatprep.mubr.f32.mxu0 0.0
      %1946 = vmatmul.mubr.f32.gmra.mrb[0].mxu0 %v1618
      %v1947 = vpop.f32.mrb[0].mxu0
      %v1948 = vadd.f32 %v1506, %v1947
      %v1949 = vpop.f32.mrb[0].mxu0
      %1950 = vmatprep.mubr.f32.mxu0 0.0
      %1951 = vmatmul.mubr.f32.gmra.mrb[0].mxu0 %v1621
      %v1952 = vpop.f32.mrb[0].mxu0
      %v1953 = vadd.f32 %v1506, %v1952
      %v1954 = vpop.f32.mrb[0].mxu0
      %1955 = vmatprep.mubr.f32.mxu0 0.0
      %1956 = vmatmul.mubr.f32.gmra.mrb[0].mxu0 %v1624
      %v1957 = vpop.f32.mrb[0].mxu0
      %v1958 = vadd.f32 %v1506, %v1957
      %v1959 = vpop.f32.mrb[0].mxu0
      %1960 = vmatprep.mubr.f32.mxu0 0.0
      %1961 = vmatmul.mubr.f32.gmra.mrb[0].mxu0 %v1627
      %v1962 = vpop.f32.mrb[0].mxu0
      %v1963 = vadd.f32 %v1506, %v1962
      %v1964 = vpop.f32.mrb[0].mxu0
      %1965 = vmatprep.mubr.f32.mxu0 0.0
      %1966 = vmatmul.mubr.f32.gmra.mrb[0].mxu0 %v1630
      %v1967 = vpop.f32.mrb[0].mxu0
      %v1968 = vadd.f32 %v1506, %v1967
      %v1969 = vpop.f32.mrb[0].mxu0
      %1970 = vmatprep.mubr.f32.mxu0 0.0
      %1971 = vmatmul.mubr.f32.gmra.mrb[0].mxu0 %v1633
      %v1972 = vpop.f32.mrb[0].mxu0
      %v1973 = vadd.f32 %v1506, %v1972
      %v1974 = vpop.f32.mrb[0].mxu0
      %1975 = vmatprep.mubr.f32.mxu0 0.0
      %1976 = vmatmul.mubr.f32.gmra.mrb[0].mxu0 %v1636
      %v1977 = vpop.f32.mrb[0].mxu0
      %v1978 = vadd.f32 %v1506, %v1977
      %v1979 = vpop.f32.mrb[0].mxu0
      %1980 = vmatprep.mubr.f32.mxu0 0.0
      %1981 = vmatmul.mubr.f32.gmra.mrb[0].mxu0 %v1639
      %v1982 = vpop.f32.mrb[0].mxu0
      %v1983 = vadd.f32 %v1506, %v1982
      %v1984 = vpop.f32.mrb[0].mxu0
      %1985 = vmatprep.mubr.f32.mxu0 0.0
      %1986 = vmatmul.mubr.f32.gmra.mrb[0].mxu0 %v1642
      %v1987 = vpop.f32.mrb[0].mxu0
      %v1988 = vadd.f32 %v1506, %v1987
      %v1989 = vpop.f32.mrb[0].mxu0
      %1990 = vmatprep.mubr.f32.mxu0 0.0
      %1991 = vmatmul.mubr.f32.gmra.mrb[0].mxu0 %v1645
      %v1992 = vpop.f32.mrb[0].mxu0
      %v1993 = vadd.f32 %v1506, %v1992
      %v1994 = vpop.f32.mrb[0].mxu0
      %1995 = vmatprep.mubr.f32.mxu0 0.0
      %1996 = vmatmul.mubr.f32.gmra.mrb[0].mxu0 %v1648
      %v1997 = vpop.f32.mrb[0].mxu0
      %v1998 = vadd.f32 %v1506, %v1997
      %v1999 = vpop.f32.mrb[0].mxu0
      %2000 = vmatprep.mubr.f32.mxu0 0.0
      %2001 = vmatmul.mubr.f32.gmra.mrb[0].mxu0 %v1651
      %v2002 = vpop.f32.mrb[0].mxu0
      %v2003 = vadd.f32 %v1506, %v2002
      %v2004 = vpop.f32.mrb[0].mxu0
      %2005 = vmatprep.mubr.f32.mxu0 0.0
      %2006 = vmatmul.mubr.f32.gmra.mrb[0].mxu0 %v1654
      %v2007 = vpop.f32.mrb[0].mxu0
      %v2008 = vadd.f32 %v1506, %v2007
      %v2009 = vpop.f32.mrb[0].mxu0
      %2010 = vmatprep.mubr.f32.mxu0 0.0
      %2011 = vmatmul.mubr.f32.gmra.mrb[0].mxu0 %v1657
      %v2012 = vpop.f32.mrb[0].mxu0
      %v2013 = vadd.f32 %v1506, %v2012
      %v2014 = vpop.f32.mrb[0].mxu0
      %2015 = vmatprep.mubr.f32.mxu0 0.0
      %2016 = vmatmul.mubr.f32.gmra.mrb[0].mxu0 %v1660
      %v2017 = vpop.f32.mrb[0].mxu0
      %v2018 = vadd.f32 %v1506, %v2017
      %v2019 = vpop.f32.mrb[0].mxu0
      %2020 = vmatprep.mubr.f32.mxu0 0.0
      %2021 = vmatmul.mubr.f32.gmra.mrb[0].mxu0 %v1663
      %v2022 = vpop.f32.mrb[0].mxu0
      %v2023 = vadd.f32 %v1506, %v2022
      %v2024 = vpop.f32.mrb[0].mxu0
      %2025 = vmatprep.mubr.f32.mxu0 0.0
      %2026 = vmatmul.mubr.f32.gmra.mrb[0].mxu0 %v1666
      %v2027 = vpop.f32.mrb[0].mxu0
      %v2028 = vadd.f32 %v1506, %v2027
      %v2029 = vpop.f32.mrb[0].mxu0
      %2030 = vmatprep.mubr.f32.mxu0 0.0
      %2031 = vmatmul.mubr.f32.gmra.mrb[0].mxu0 %v1669
      %v2032 = vpop.f32.mrb[0].mxu0
      %v2033 = vadd.f32 %v1506, %v2032
      %v2034 = vpop.f32.mrb[0].mxu0
      %2035 = vmatprep.mubr.f32.mxu0 0.0
      %2036 = vmatmul.mubr.f32.gmra.mrb[0].mxu0 %v1672
      %v2037 = vpop.f32.mrb[0].mxu0
      %v2038 = vadd.f32 %v1506, %v2037
      %v2039 = vpop.f32.mrb[0].mxu0
      %2040 = vmatprep.mubr.f32.mxu0 0.0
      %2041 = vmatmul.mubr.f32.gmra.mrb[0].mxu0 %v1675
      %v2042 = vpop.f32.mrb[0].mxu0
      %v2043 = vadd.f32 %v1506, %v2042
      %v2044 = vpop.f32.mrb[0].mxu0
      %2045 = vmatprep.mubr.f32.mxu0 0.0
      %2046 = vmatmul.mubr.f32.gmra.mrb[0].mxu0 %v1678
      %v2047 = vpop.f32.mrb[0].mxu0
      %v2048 = vadd.f32 %v1506, %v2047
      %v2049 = vpop.f32.mrb[0].mxu0
      %2050 = vmatprep.mubr.f32.mxu0 0.0
      %2051 = vmatmul.mubr.f32.gmra.mrb[0].mxu0 %v1681
      %v2052 = vpop.f32.mrb[0].mxu0
      %v2053 = vadd.f32 %v1506, %v2052
      %v2054 = vpop.f32.mrb[0].mxu0
      %2055 = vmatprep.mubr.f32.mxu0 0.0
      %2056 = vmatmul.mubr.f32.gmra.mrb[0].mxu0 %v1684
      %v2057 = vpop.f32.mrb[0].mxu0
      %v2058 = vadd.f32 %v1506, %v2057
      %v2059 = vpop.f32.mrb[0].mxu0
      %2060 = vmatprep.mubr.f32.mxu0 0.0
      %2061 = vmatmul.mubr.f32.gmra.mrb[0].mxu0 %v1687
      %v2062 = vpop.f32.mrb[0].mxu0
      %v2063 = vadd.f32 %v1506, %v2062
      %v2064 = vpop.f32.mrb[0].mxu0
      %2065 = vmatprep.mubr.f32.mxu0 0.0
      %2066 = vmatmul.mubr.f32.gmra.mrb[0].mxu0 %v1690
      %v2067 = vpop.f32.mrb[0].mxu0
      %v2068 = vadd.f32 %v1506, %v2067
      %v2069 = vpop.f32.mrb[0].mxu0
      %2070 = vmatprep.mubr.f32.mxu0 0.0
      %2071 = vmatmul.mubr.f32.gmra.mrb[0].mxu0 %v1693
      %v2072 = vpop.f32.mrb[0].mxu0
      %v2073 = vadd.f32 %v1506, %v2072
      %v2074 = vpop.f32.mrb[0].mxu0
      %2075 = vmatprep.mubr.f32.mxu0 0.0
      %2076 = vmatmul.mubr.f32.gmra.mrb[0].mxu0 %v1696
      %v2077 = vpop.f32.mrb[0].mxu0
      %v2078 = vadd.f32 %v1506, %v2077
      %v2079 = vpop.f32.mrb[0].mxu0
      %2080 = vmatprep.mubr.f32.mxu0 0.0
      %2081 = vmatmul.mubr.f32.gmra.mrb[0].mxu0 %v1699
      %v2082 = vpop.f32.mrb[0].mxu0
      %v2083 = vadd.f32 %v1506, %v2082
      %v2084 = vpop.f32.mrb[0].mxu0
      %2085 = vdwg.mxu0
      %v2086 = vmax.f32 %v1768, 0.0
      %v2087 = vmax.f32 %v1773, 0.0
      %v2088 = vmax.f32 %v1778, 0.0
      %v2089 = vmax.f32 %v1783, 0.0
      %v2090 = vmax.f32 %v1788, 0.0
      %v2091 = vmax.f32 %v1793, 0.0
      %v2092 = vmax.f32 %v1798, 0.0
      %v2093 = vmax.f32 %v1803, 0.0
      %v2094 = vmax.f32 %v1808, 0.0
      %v2095 = vmax.f32 %v1813, 0.0
      %v2096 = vmax.f32 %v1818, 0.0
      %v2097 = vmax.f32 %v1823, 0.0
      %v2098 = vmax.f32 %v1828, 0.0
      %v2099 = vmax.f32 %v1833, 0.0
      %v2100 = vmax.f32 %v1838, 0.0
      %v2101 = vmax.f32 %v1843, 0.0
      %v2102 = vmax.f32 %v1848, 0.0
      %v2103 = vmax.f32 %v1853, 0.0
      %v2104 = vmax.f32 %v1858, 0.0
      %v2105 = vmax.f32 %v1863, 0.0
      %v2106 = vmax.f32 %v1868, 0.0
      %v2107 = vmax.f32 %v1873, 0.0
      %v2108 = vmax.f32 %v1878, 0.0
      %v2109 = vmax.f32 %v1883, 0.0
      %v2110 = vmax.f32 %v1888, 0.0
      %v2111 = vmax.f32 %v1893, 0.0
      %v2112 = vmax.f32 %v1898, 0.0
      %v2113 = vmax.f32 %v1903, 0.0
      %v2114 = vmax.f32 %v1908, 0.0
      %v2115 = vmax.f32 %v1913, 0.0
      %v2116 = vmax.f32 %v1918, 0.0
      %v2117 = vmax.f32 %v1923, 0.0
      %v2118 = vmax.f32 %v1928, 0.0
      %v2119 = vmax.f32 %v1933, 0.0
      %v2120 = vmax.f32 %v1938, 0.0
      %v2121 = vmax.f32 %v1943, 0.0
      %v2122 = vmax.f32 %v1948, 0.0
      %v2123 = vmax.f32 %v1953, 0.0
      %v2124 = vmax.f32 %v1958, 0.0
      %v2125 = vmax.f32 %v1963, 0.0
      %v2126 = vmax.f32 %v1968, 0.0
      %v2127 = vmax.f32 %v1973, 0.0
      %v2128 = vmax.f32 %v1978, 0.0
      %v2129 = vmax.f32 %v1983, 0.0
      %v2130 = vmax.f32 %v1988, 0.0
      %v2131 = vmax.f32 %v1993, 0.0
      %v2132 = vmax.f32 %v1998, 0.0
      %v2133 = vmax.f32 %v2003, 0.0
      %v2134 = vmax.f32 %v2008, 0.0
      %v2135 = vmax.f32 %v2013, 0.0
      %v2136 = vmax.f32 %v2018, 0.0
      %v2137 = vmax.f32 %v2023, 0.0
      %v2138 = vmax.f32 %v2028, 0.0
      %v2139 = vmax.f32 %v2033, 0.0
      %v2140 = vmax.f32 %v2038, 0.0
      %v2141 = vmax.f32 %v2043, 0.0
      %v2142 = vmax.f32 %v2048, 0.0
      %v2143 = vmax.f32 %v2053, 0.0
      %v2144 = vmax.f32 %v2058, 0.0
      %v2145 = vmax.f32 %v2063, 0.0
      %v2146 = vmax.f32 %v2068, 0.0
      %v2147 = vmax.f32 %v2073, 0.0
      %v2148 = vmax.f32 %v2078, 0.0
      %v2149 = vmax.f32 %v2083, 0.0
      %vm2150 = vcmask 523264
      %2151 = vst.msk [vmem:[%s380] sm:$0xff] %vm2150, %v2086
      %2152 = vst.msk [vmem:[%s380 + $0x8] sm:$0xff] %vm2150, %v2087
      %2153 = vst.msk [vmem:[%s380 + $0x10] sm:$0xff] %vm2150, %v2088
      %2154 = vst.msk [vmem:[%s380 + $0x18] sm:$0xff] %vm2150, %v2089
      %2155 = vst.msk [vmem:[%s380 + $0x20] sm:$0xff] %vm2150, %v2090
      %2156 = vst.msk [vmem:[%s380 + $0x28] sm:$0xff] %vm2150, %v2091
      %2157 = vst.msk [vmem:[%s380 + $0x30] sm:$0xff] %vm2150, %v2092
      %2158 = vst.msk [vmem:[%s380 + $0x38] sm:$0xff] %vm2150, %v2093
      %2159 = vst.msk [vmem:[%s380 + $0x40] sm:$0xff] %vm2150, %v2094
      %2160 = vst.msk [vmem:[%s380 + $0x48] sm:$0xff] %vm2150, %v2095
      %2161 = vst.msk [vmem:[%s380 + $0x50] sm:$0xff] %vm2150, %v2096
      %2162 = vst.msk [vmem:[%s380 + $0x58] sm:$0xff] %vm2150, %v2097
      %2163 = vst.msk [vmem:[%s380 + $0x60] sm:$0xff] %vm2150, %v2098
      %2164 = vst.msk [vmem:[%s380 + $0x68] sm:$0xff] %vm2150, %v2099
      %2165 = vst.msk [vmem:[%s380 + $0x70] sm:$0xff] %vm2150, %v2100
      %2166 = vst.msk [vmem:[%s380 + $0x78] sm:$0xff] %vm2150, %v2101
      %2167 = vst.msk [vmem:[%s380 + $0x80] sm:$0xff] %vm2150, %v2102
      %2168 = vst.msk [vmem:[%s380 + $0x88] sm:$0xff] %vm2150, %v2103
      %2169 = vst.msk [vmem:[%s380 + $0x90] sm:$0xff] %vm2150, %v2104
      %2170 = vst.msk [vmem:[%s380 + $0x98] sm:$0xff] %vm2150, %v2105
      %2171 = vst.msk [vmem:[%s380 + $0xa0] sm:$0xff] %vm2150, %v2106
      %2172 = vst.msk [vmem:[%s380 + $0xa8] sm:$0xff] %vm2150, %v2107
      %2173 = vst.msk [vmem:[%s380 + $0xb0] sm:$0xff] %vm2150, %v2108
      %2174 = vst.msk [vmem:[%s380 + $0xb8] sm:$0xff] %vm2150, %v2109
      %2175 = vst.msk [vmem:[%s380 + $0xc0] sm:$0xff] %vm2150, %v2110
      %2176 = vst.msk [vmem:[%s380 + $0xc8] sm:$0xff] %vm2150, %v2111
      %2177 = vst.msk [vmem:[%s380 + $0xd0] sm:$0xff] %vm2150, %v2112
      %2178 = vst.msk [vmem:[%s380 + $0xd8] sm:$0xff] %vm2150, %v2113
      %2179 = vst.msk [vmem:[%s380 + $0xe0] sm:$0xff] %vm2150, %v2114
      %2180 = vst.msk [vmem:[%s380 + $0xe8] sm:$0xff] %vm2150, %v2115
      %2181 = vst.msk [vmem:[%s380 + $0xf0] sm:$0xff] %vm2150, %v2116
      %2182 = vst.msk [vmem:[%s380 + $0xf8] sm:$0xff] %vm2150, %v2117
      %2183 = vst.msk [vmem:[%s380 + $0x100] sm:$0xff] %vm2150, %v2118
      %2184 = vst.msk [vmem:[%s380 + $0x108] sm:$0xff] %vm2150, %v2119
      %2185 = vst.msk [vmem:[%s380 + $0x110] sm:$0xff] %vm2150, %v2120
      %2186 = vst.msk [vmem:[%s380 + $0x118] sm:$0xff] %vm2150, %v2121
      %2187 = vst.msk [vmem:[%s380 + $0x120] sm:$0xff] %vm2150, %v2122
      %2188 = vst.msk [vmem:[%s380 + $0x128] sm:$0xff] %vm2150, %v2123
      %2189 = vst.msk [vmem:[%s380 + $0x130] sm:$0xff] %vm2150, %v2124
      %2190 = vst.msk [vmem:[%s380 + $0x138] sm:$0xff] %vm2150, %v2125
      %2191 = vst.msk [vmem:[%s380 + $0x140] sm:$0xff] %vm2150, %v2126
      %2192 = vst.msk [vmem:[%s380 + $0x148] sm:$0xff] %vm2150, %v2127
      %2193 = vst.msk [vmem:[%s380 + $0x150] sm:$0xff] %vm2150, %v2128
      %2194 = vst.msk [vmem:[%s380 + $0x158] sm:$0xff] %vm2150, %v2129
      %2195 = vst.msk [vmem:[%s380 + $0x160] sm:$0xff] %vm2150, %v2130
      %2196 = vst.msk [vmem:[%s380 + $0x168] sm:$0xff] %vm2150, %v2131
      %2197 = vst.msk [vmem:[%s380 + $0x170] sm:$0xff] %vm2150, %v2132
      %2198 = vst.msk [vmem:[%s380 + $0x178] sm:$0xff] %vm2150, %v2133
      %2199 = vst.msk [vmem:[%s380 + $0x180] sm:$0xff] %vm2150, %v2134
      %2200 = vst.msk [vmem:[%s380 + $0x188] sm:$0xff] %vm2150, %v2135
      %2201 = vst.msk [vmem:[%s380 + $0x190] sm:$0xff] %vm2150, %v2136
      %2202 = vst.msk [vmem:[%s380 + $0x198] sm:$0xff] %vm2150, %v2137
      %2203 = vst.msk [vmem:[%s380 + $0x1a0] sm:$0xff] %vm2150, %v2138
      %2204 = vst.msk [vmem:[%s380 + $0x1a8] sm:$0xff] %vm2150, %v2139
      %2205 = vst.msk [vmem:[%s380 + $0x1b0] sm:$0xff] %vm2150, %v2140
      %2206 = vst.msk [vmem:[%s380 + $0x1b8] sm:$0xff] %vm2150, %v2141
      %2207 = vst.msk [vmem:[%s380 + $0x1c0] sm:$0xff] %vm2150, %v2142
      %2208 = vst.msk [vmem:[%s380 + $0x1c8] sm:$0xff] %vm2150, %v2143
      %2209 = vst.msk [vmem:[%s380 + $0x1d0] sm:$0xff] %vm2150, %v2144
      %2210 = vst.msk [vmem:[%s380 + $0x1d8] sm:$0xff] %vm2150, %v2145
      %2211 = vst.msk [vmem:[%s380 + $0x1e0] sm:$0xff] %vm2150, %v2146
      %2212 = vst.msk [vmem:[%s380 + $0x1e8] sm:$0xff] %vm2150, %v2147
      %2213 = vst.msk [vmem:[%s380 + $0x1f0] sm:$0xff] %vm2150, %v2148
      %2214 = vst.msk [vmem:[%s380 + $0x1f8] sm:$0xff] %vm2150, %v2149
      %s2215 = smul.u32 64, %s21
      %p2216 = scmp.lt.s32.totalorder %s20, 1
      %s2217 = scalar_select %p2216, %s20, 1
      %p2218 = scmp.lt.s32.totalorder %s2215, 63
      %s2219 = scalar_select %p2218, %s2215, 63
      %s2220 = smul.addr %s2217, 64
      %s2221 = sadd.s32 %s2219, %s2220
      %s2222 = smul.addr %s2221, 8
      %s2223 = scalar_lea.vmem %s5, %s2222
      // Predicated region
      $region41: #{tpu_custom_call.1} parent=39 // pred_check
        %p2224 = pneg %p190
      $region42: #{tpu_custom_call.1} parent=39 // pred_check_branch
        %2226 = sbr.rel (%p2224) target = $region44
      $region43: #{tpu_custom_call.1} parent=39 // pred_region
        %s2227 = smul.u32 64, %s21
      $region44: #{tpu_custom_call.1} parent=39 // pred_fallthru
        _
    $region40: #{tpu_custom_call.1} parent=5 // pred_fallthru
      _
    %p2228 = scmp.le.s32.totalorder 2, %s11
    // Predicated region
    $region45: #{tpu_custom_call.1} parent=5 // pred_check
      %p2229 = pneg %p2228
    $region46: #{tpu_custom_call.1} parent=5 // pred_check_branch
      %2231 = sbr.rel (%p2229) target = $region48
    $region47: #{tpu_custom_call.1} parent=5 // pred_region
      %s2232 = ssub.s32 %s11, 2
      // Predicated region
      $region49: #{tpu_custom_call.1} parent=47 // pred_check
        %p2233 = pneg %p196
      $region50: #{tpu_custom_call.1} parent=47 // pred_check_branch
        %2235 = sbr.rel (%p2233) target = $region52
      $region51: #{tpu_custom_call.1} parent=47 // pred_region
        %s2236 = smul.u32 64, %s23
        %p2237 = scmp.lt.s32.totalorder %s22, 1
        %s2238 = scalar_select %p2237, %s22, 1
        %p2239 = scmp.lt.s32.totalorder %s2236, 63
        %s2240 = scalar_select %p2239, %s2236, 63
        %s2241 = smul.addr %s2238, 64
        %s2242 = sadd.s32 %s2240, %s2241
        %s2243 = smul.addr %s2242, 8
        %s2244 = scalar_lea.vmem %s5, %s2243
      $region52: #{tpu_custom_call.1} parent=47 // pred_fallthru
        _
    $region48: #{tpu_custom_call.1} parent=5 // pred_fallthru
      _
  $region6: #{tpu_custom_call.1} parent=0 // loop_footer
    %s15 = sadd.s32 1, %s11
  $region7: #{tpu_custom_call.1} parent=0 // loop_footer_branch
    %10 = sbr.rel target = $region3
  $region8: #{tpu_custom_call.1} parent=0 // loop_exit
    _

</llo_original>
